<compile_context>
chip_gen: v5e
topology: v5e:2x2
jax: 0.10.0
libtpu: 0.0.40
codegen_flags: <defaults>
</compile_context>

<pallas_src>
import math
from functools import partial

import numpy as np
import jax
import jax.numpy as jnp
from jax.experimental import pallas as pl
from jax.experimental.pallas import tpu as pltpu


def _mha_rotary_kernel(x_ref, w_ref, b_ref, cos_ref, sin_ref, woh_ref, bo_ref,
                       out_ref, *, n_head, head_size):
    H, hs = n_head, head_size
    HS = H * hs
    T, C = x_ref.shape
    scale = 1.0 / math.sqrt(hs)

    x = x_ref[...].astype(jnp.bfloat16)                           # (T, C)

    # One lane-dense fused projection: [Q | K | V | Q@R | K@R], f32 accumulation.
    proj = jnp.dot(x, w_ref[...], preferred_element_type=jnp.float32)
    proj = proj + b_ref[...]                                       # (T, 5*HS) f32

    cos = cos_ref[...]                                             # (T, HS) f32
    sin = sin_ref[...]                                             # (T, HS) f32

    # Rotary embedding: rotate_half was folded into the weights, so this is
    # pure VPU math in f32 (symmetric precision on the cos/sin branches).
    q = proj[:, 0 * HS:1 * HS] * cos + proj[:, 3 * HS:4 * HS] * sin
    k = proj[:, 1 * HS:2 * HS] * cos + proj[:, 4 * HS:5 * HS] * sin
    v = proj[:, 2 * HS:3 * HS]

    # Cast each MXU operand to bf16 exactly once, right before its consumer.
    q = q.astype(jnp.bfloat16)
    k = k.astype(jnp.bfloat16)
    v = v.astype(jnp.bfloat16)

    # Per-head scaled-dot-product attention (no mask: module default), with the
    # output projection accumulated straight into one (T, C) f32 buffer.
    # TODO(synk): for production T, replace the (T, T) score materialisation
    #             with a q-tile grid axis + flash-style online-softmax KV loop.
    acc = jnp.zeros((T, C), jnp.float32)
    for h in range(H):                                             # static unroll
        sl = slice(h * hs, (h + 1) * hs)
        s = jax.lax.dot_general(q[:, sl], k[:, sl],
                                (((1,), (1,)), ((), ())),
                                preferred_element_type=jnp.float32) * scale
        s = s - jnp.max(s, axis=-1, keepdims=True)                 # f32 softmax
        p = jnp.exp(s)
        p = p * pl.reciprocal(jnp.sum(p, axis=-1, keepdims=True), approx=True)
        y_h = jnp.dot(p.astype(jnp.bfloat16), v[:, sl],
                      preferred_element_type=jnp.float32)          # (T, hs) f32
        acc = acc + jnp.dot(y_h.astype(jnp.bfloat16), woh_ref[h],
                            preferred_element_type=jnp.float32)    # (T, C) f32

    out_ref[...] = (acc + bo_ref[...]).astype(out_ref.dtype)


def make_rotary_tables(T, rotary_ndims, base):
    inv_freq = 1.0 / (base ** (jnp.arange(0, rotary_ndims, 2, dtype=jnp.float32)
                               / rotary_ndims))
    t = jnp.arange(T, dtype=jnp.float32)
    freqs = jnp.einsum("i,j->ij", t, inv_freq)                     # (T, rot//2)
    emb = jnp.concatenate([freqs, freqs], axis=-1)                 # (T, rot)
    return jnp.cos(emb), jnp.sin(emb)


def pack_params(params, *, n_head, head_size, rotary_ndims, T, base):
    """Repack nn.Linear-style weights into the kernel's fused layout.

    rotate_half is expressed as a per-head sign-folded shuffle matrix R
    (zero on pass-through channels) and folded into the Q/K projection
    weights and biases on the host, so the kernel never shuffles lanes.
    """
    C = params["wq"].shape[0]
    H, hs = n_head, head_size
    half = rotary_ndims // 2

    # Per-head rotate_half shuffle matrix (hs, hs); zero outside rotary dims.
    r = np.zeros((hs, hs), np.float32)
    for d in range(half):
        r[d + half, d] = -1.0      # rotated[d]        = -x[d + half]
        r[d, d + half] = 1.0       # rotated[d + half] =  x[d]
    # Block-diagonal over heads so it acts on the head-major flat (H*hs) axis.
    r_big = jnp.asarray(np.kron(np.eye(H, dtype=np.float32), r))   # (HS, HS)

    wq, wk, wv = params["wq"], params["wk"], params["wv"]          # (C, HS)
    bq, bk, bv = params["bq"], params["bk"], params["bv"]          # (1, HS)

    wqr, wkr = wq @ r_big, wk @ r_big
    bqr, bkr = bq @ r_big, bk @ r_big

    w_fused = jnp.concatenate([wq, wk, wv, wqr, wkr], axis=1).astype(jnp.bfloat16)
    b_fused = jnp.concatenate([bq, bk, bv, bqr, bkr], axis=1).astype(jnp.float32)

    # cos/sin padded to head_size (cos=1, sin=0 on pass-through) and tiled per head.
    cos_r, sin_r = make_rotary_tables(T, rotary_ndims, base)
    pad = hs - rotary_ndims
    cos_h = jnp.concatenate([cos_r, jnp.ones((T, pad), jnp.float32)], axis=-1)
    sin_h = jnp.concatenate([sin_r, jnp.zeros((T, pad), jnp.float32)], axis=-1)
    cos_t = jnp.tile(cos_h, (1, H))                                # (T, HS)
    sin_t = jnp.tile(sin_h, (1, H))                                # (T, HS)

    wo_h = params["wo"].reshape(H, hs, C).astype(jnp.bfloat16)     # (H, hs, C)
    bo = params["bo"].astype(jnp.float32)                          # (1, C)
    return (w_fused, b_fused, cos_t, sin_t, wo_h, bo)


def mha_rotary_forward(x, packed, *, n_head, head_size):
    B, T, C = x.shape
    w_fused, b_fused, cos_t, sin_t, wo_h, bo = packed
    kernel = partial(_mha_rotary_kernel, n_head=n_head, head_size=head_size)

    def build(single_buffer_weights):
        def weight_spec(shape):
            nd = len(shape)
            idx = lambda b, nd=nd: (0,) * nd
            if single_buffer_weights:
                # Constant across the grid -> no need for double buffering.
                return pl.BlockSpec(shape, idx, pipeline_mode=pl.Buffered(1))
            return pl.BlockSpec(shape, idx)

        return pl.pallas_call(
            kernel,
            out_shape=jax.ShapeDtypeStruct((B, T, C), x.dtype),
            grid_spec=pltpu.PrefetchScalarGridSpec(
                num_scalar_prefetch=0,
                grid=(B,),
                in_specs=[
                    pl.BlockSpec((None, T, C), lambda b: (b, 0, 0)),  # x[b] -> (T, C)
                    weight_spec(w_fused.shape),   # (C, 5*H*hs)  bf16
                    weight_spec(b_fused.shape),   # (1, 5*H*hs)  f32
                    weight_spec(cos_t.shape),     # (T, H*hs)    f32
                    weight_spec(sin_t.shape),     # (T, H*hs)    f32
                    weight_spec(wo_h.shape),      # (H, hs, C)   bf16
                    weight_spec(bo.shape),        # (1, C)       f32
                ],
                out_specs=pl.BlockSpec((None, T, C), lambda b: (b, 0, 0)),
            ),
            compiler_params=pltpu.CompilerParams(
                dimension_semantics=("parallel",),
                vmem_limit_bytes=32 * 1024 * 1024,
            ),
        )

    args = (x, w_fused, b_fused, cos_t, sin_t, wo_h, bo)
    try:
        return build(True)(*args)
    except Exception:
        # pl.Buffered(1) single-buffering not accepted by this JAX build:
        # fall back to default (double-buffered) BlockSpecs for the weights.
        return build(False)(*args)


def reference_forward(x, params, cos, sin, *, n_head, head_size, rotary_ndims):
    """Pure-JAX f32 reference matching the PyTorch forward exactly."""
    B, T, C = x.shape
    q = x @ params["wq"] + params["bq"][0]
    k = x @ params["wk"] + params["bk"][0]
    v = x @ params["wv"] + params["bv"][0]

    def split_heads(t):
        return t.reshape(B, T, n_head, head_size).transpose(0, 2, 1, 3)

    q, k, v = split_heads(q), split_heads(k), split_heads(v)
    qr, qp = q[..., :rotary_ndims], q[..., rotary_ndims:]
    kr, kp = k[..., :rotary_ndims], k[..., rotary_ndims:]
    half = rotary_ndims // 2
    rot = lambda t: jnp.concatenate([-t[..., half:], t[..., :half]], axis=-1)
    qr = qr * cos + rot(qr) * sin
    kr = kr * cos + rot(kr) * sin
    q = jnp.concatenate([qr, qp], axis=-1)
    k = jnp.concatenate([kr, kp], axis=-1)
    att = q @ jnp.swapaxes(k, -2, -1) * (1.0 / math.sqrt(head_size))
    att = jax.nn.softmax(att, axis=-1)
    y = (att @ v).transpose(0, 2, 1, 3).reshape(B, T, -1)
    return y @ params["wo"] + params["bo"][0]


if __name__ == "__main__":
    # Module config (small): n_embd=32, n_attn=32, n_head=4, ctx_len=16.
    # NOTE: toy shapes (C=32, hs=8) are a correctness harness only — they are
    # not lane-dense; production shapes should pad/choose C, hs multiples of 128.
    B, T = 2, 8
    n_embd, n_attn, n_head, ctx_len = 32, 32, 4, 16
    head_size = n_attn // n_head            # 8
    rotary_ndims = int(head_size * 0.5)     # 4

    key = jax.random.PRNGKey(0)
    ks = jax.random.split(key, 10)
    init = lambda k, shape, fan_in: (jax.random.normal(k, shape, jnp.float32)
                                     / math.sqrt(fan_in))
    params = {
        "wq": init(ks[0], (n_embd, n_attn), n_embd),
        "bq": init(ks[1], (1, n_attn), n_embd),
        "wk": init(ks[2], (n_embd, n_attn), n_embd),
        "bk": init(ks[3], (1, n_attn), n_embd),
        "wv": init(ks[4], (n_embd, n_attn), n_embd),
        "bv": init(ks[5], (1, n_attn), n_embd),
        "wo": init(ks[6], (n_attn, n_embd), n_attn),
        "bo": init(ks[7], (1, n_embd), n_attn),
    }
    x = jax.random.normal(ks[8], (B, T, n_embd), jnp.float32)

    packed = pack_params(params, n_head=n_head, head_size=head_size,
                         rotary_ndims=rotary_ndims, T=T, base=ctx_len)

    out = mha_rotary_forward(x, packed, n_head=n_head, head_size=head_size)
    out = jax.block_until_ready(out)

    cos, sin = make_rotary_tables(T, rotary_ndims, base=ctx_len)
    ref = reference_forward(x, params, cos, sin, n_head=n_head,
                            head_size=head_size, rotary_ndims=rotary_ndims)

    assert out.shape == (B, T, n_embd)
    max_err = float(jnp.max(jnp.abs(out - ref)))
    # Tolerance accounts for bf16 MXU operands (f32 accumulation) + approx recip.
    assert jnp.allclose(out, ref, rtol=3e-2, atol=3e-2), \
        f"mismatch vs reference (max abs err {max_err})"
    print("KERNEL_OK")
</pallas_src>

<mosaic_0001>
module attributes {stable_mosaic.version = 11 : i64} {
  func.func @_mha_rotary_kernel(%arg0: i32, %arg1: memref<1x8x32xf32, #tpu.memory_space<vmem>>, %arg2: memref<32x160xbf16, #tpu.memory_space<vmem>>, %arg3: memref<1x160xf32, #tpu.memory_space<vmem>>, %arg4: memref<8x32xf32, #tpu.memory_space<vmem>>, %arg5: memref<8x32xf32, #tpu.memory_space<vmem>>, %arg6: memref<4x8x32xbf16, #tpu.memory_space<vmem>>, %arg7: memref<1x32xf32, #tpu.memory_space<vmem>>, %arg8: memref<1x8x32xf32, #tpu.memory_space<vmem>>) attributes {dimension_semantics = [#tpu.dimension_semantics<parallel>], iteration_bounds = array<i64: 2>, scalar_prefetch = 0 : i64, scratch_operands = 0 : i64, tpu.core_type = #tpu.core_type<tc>, window_params = [{transform_indices = @transform_0, window_bounds = array<i64: 1, 8, 32>}, {pipeline_mode = #tpu.pipeline_mode<synchronous>, transform_indices = @transform_1, window_bounds = array<i64: 32, 160>}, {pipeline_mode = #tpu.pipeline_mode<synchronous>, transform_indices = @transform_2, window_bounds = array<i64: 1, 160>}, {pipeline_mode = #tpu.pipeline_mode<synchronous>, transform_indices = @transform_3, window_bounds = array<i64: 8, 32>}, {pipeline_mode = #tpu.pipeline_mode<synchronous>, transform_indices = @transform_4, window_bounds = array<i64: 8, 32>}, {pipeline_mode = #tpu.pipeline_mode<synchronous>, transform_indices = @transform_5, window_bounds = array<i64: 4, 8, 32>}, {pipeline_mode = #tpu.pipeline_mode<synchronous>, transform_indices = @transform_6, window_bounds = array<i64: 1, 32>}, {transform_indices = @transform_7, window_bounds = array<i64: 1, 8, 32>}]} {
    %c0 = arith.constant 0 : index
    %c0_0 = arith.constant 0 : index
    %c0_1 = arith.constant 0 : index
    %0 = vector.load %arg1[%c0, %c0_0, %c0_1] : memref<1x8x32xf32, #tpu.memory_space<vmem>>, vector<1x8x32xf32>
    %1 = vector.shape_cast %0 : vector<1x8x32xf32> to vector<8x32xf32>
    %2 = arith.truncf %1 : vector<8x32xf32> to vector<8x32xbf16>
    %c0_2 = arith.constant 0 : index
    %c0_3 = arith.constant 0 : index
    %3 = vector.load %arg2[%c0_2, %c0_3] : memref<32x160xbf16, #tpu.memory_space<vmem>>, vector<32x160xbf16>
    %cst = arith.constant dense<0.000000e+00> : vector<8x160xf32>
    %4 = tpu.matmul %2, %3, %cst {dimension_numbers = #tpu.dot_dimension_numbers<[1], [0], [0], [1], [0, 0, 1, 1], [], []>} : vector<8x32xbf16>, vector<32x160xbf16>, vector<8x160xf32> -> vector<8x160xf32>
    %c0_4 = arith.constant 0 : index
    %c0_5 = arith.constant 0 : index
    %5 = vector.load %arg3[%c0_4, %c0_5] : memref<1x160xf32, #tpu.memory_space<vmem>>, vector<1x160xf32>
    %6 = vector.broadcast %5 : vector<1x160xf32> to vector<8x160xf32>
    %7 = arith.addf %4, %6 : vector<8x160xf32>
    %c0_6 = arith.constant 0 : index
    %c0_7 = arith.constant 0 : index
    %8 = vector.load %arg4[%c0_6, %c0_7] : memref<8x32xf32, #tpu.memory_space<vmem>>, vector<8x32xf32>
    %c0_8 = arith.constant 0 : index
    %c0_9 = arith.constant 0 : index
    %9 = vector.load %arg5[%c0_8, %c0_9] : memref<8x32xf32, #tpu.memory_space<vmem>>, vector<8x32xf32>
    %10 = vector.extract_strided_slice %7 {offsets = [0, 0], sizes = [8, 32], strides = [1, 1]} : vector<8x160xf32> to vector<8x32xf32>
    %11 = arith.mulf %10, %8 : vector<8x32xf32>
    %12 = vector.extract_strided_slice %7 {offsets = [0, 96], sizes = [8, 32], strides = [1, 1]} : vector<8x160xf32> to vector<8x32xf32>
    %13 = arith.mulf %12, %9 : vector<8x32xf32>
    %14 = arith.addf %11, %13 : vector<8x32xf32>
    %15 = vector.extract_strided_slice %7 {offsets = [0, 32], sizes = [8, 32], strides = [1, 1]} : vector<8x160xf32> to vector<8x32xf32>
    %16 = arith.mulf %15, %8 : vector<8x32xf32>
    %17 = vector.extract_strided_slice %7 {offsets = [0, 128], sizes = [8, 32], strides = [1, 1]} : vector<8x160xf32> to vector<8x32xf32>
    %18 = arith.mulf %17, %9 : vector<8x32xf32>
    %19 = arith.addf %16, %18 : vector<8x32xf32>
    %20 = vector.extract_strided_slice %7 {offsets = [0, 64], sizes = [8, 32], strides = [1, 1]} : vector<8x160xf32> to vector<8x32xf32>
    %21 = arith.truncf %14 : vector<8x32xf32> to vector<8x32xbf16>
    %22 = arith.truncf %19 : vector<8x32xf32> to vector<8x32xbf16>
    %23 = arith.truncf %20 : vector<8x32xf32> to vector<8x32xbf16>
    %cst_10 = arith.constant 0.000000e+00 : f32
    %24 = vector.broadcast %cst_10 : f32 to vector<8x32xf32>
    %25 = vector.extract_strided_slice %21 {offsets = [0, 0], sizes = [8, 8], strides = [1, 1]} : vector<8x32xbf16> to vector<8x8xbf16>
    %26 = vector.extract_strided_slice %22 {offsets = [0, 0], sizes = [8, 8], strides = [1, 1]} : vector<8x32xbf16> to vector<8x8xbf16>
    %cst_11 = arith.constant dense<0.000000e+00> : vector<8x8xf32>
    %27 = tpu.matmul %25, %26, %cst_11 {dimension_numbers = #tpu.dot_dimension_numbers<[1], [1], [0], [0], [0, 0, 1, 0], [], []>} : vector<8x8xbf16>, vector<8x8xbf16>, vector<8x8xf32> -> vector<8x8xf32>
    %cst_12 = arith.constant 0.353553385 : f32
    %28 = vector.broadcast %cst_12 : f32 to vector<8x8xf32>
    %29 = arith.mulf %27, %28 : vector<8x8xf32>
    %cst_13 = arith.constant dense<0xFF800000> : vector<8xf32>
    %30 = vector.multi_reduction <maximumf>, %29, %cst_13 [1] : vector<8x8xf32> to vector<8xf32>
    %31 = vector.shape_cast %30 : vector<8xf32> to vector<8x1xf32>
    %32 = vector.broadcast %31 : vector<8x1xf32> to vector<8x8xf32>
    %33 = arith.subf %29, %32 : vector<8x8xf32>
    %34 = math.exp %33 : vector<8x8xf32>
    %cst_14 = arith.constant dense<0.000000e+00> : vector<8xf32>
    %35 = vector.multi_reduction <add>, %34, %cst_14 [1] : vector<8x8xf32> to vector<8xf32>
    %36 = vector.shape_cast %35 : vector<8xf32> to vector<8x1xf32>
    %37 = tpu.reciprocal %36 {approx = true} : vector<8x1xf32> -> vector<8x1xf32>
    %38 = vector.broadcast %37 : vector<8x1xf32> to vector<8x8xf32>
    %39 = arith.mulf %34, %38 : vector<8x8xf32>
    %40 = arith.truncf %39 : vector<8x8xf32> to vector<8x8xbf16>
    %41 = vector.extract_strided_slice %23 {offsets = [0, 0], sizes = [8, 8], strides = [1, 1]} : vector<8x32xbf16> to vector<8x8xbf16>
    %cst_15 = arith.constant dense<0.000000e+00> : vector<8x8xf32>
    %42 = tpu.matmul %40, %41, %cst_15 {dimension_numbers = #tpu.dot_dimension_numbers<[1], [0], [0], [1], [0, 0, 1, 1], [], []>} : vector<8x8xbf16>, vector<8x8xbf16>, vector<8x8xf32> -> vector<8x8xf32>
    %43 = arith.truncf %42 : vector<8x8xf32> to vector<8x8xbf16>
    %c0_16 = arith.constant 0 : index
    %c0_17 = arith.constant 0 : index
    %c0_18 = arith.constant 0 : index
    %44 = vector.load %arg6[%c0_16, %c0_17, %c0_18] : memref<4x8x32xbf16, #tpu.memory_space<vmem>>, vector<1x8x32xbf16>
    %45 = vector.shape_cast %44 : vector<1x8x32xbf16> to vector<8x32xbf16>
    %cst_19 = arith.constant dense<0.000000e+00> : vector<8x32xf32>
    %46 = tpu.matmul %43, %45, %cst_19 {dimension_numbers = #tpu.dot_dimension_numbers<[1], [0], [0], [1], [0, 0, 1, 1], [], []>} : vector<8x8xbf16>, vector<8x32xbf16>, vector<8x32xf32> -> vector<8x32xf32>
    %47 = arith.addf %24, %46 : vector<8x32xf32>
    %48 = vector.extract_strided_slice %21 {offsets = [0, 8], sizes = [8, 8], strides = [1, 1]} : vector<8x32xbf16> to vector<8x8xbf16>
    %49 = vector.extract_strided_slice %22 {offsets = [0, 8], sizes = [8, 8], strides = [1, 1]} : vector<8x32xbf16> to vector<8x8xbf16>
    %cst_20 = arith.constant dense<0.000000e+00> : vector<8x8xf32>
    %50 = tpu.matmul %48, %49, %cst_20 {dimension_numbers = #tpu.dot_dimension_numbers<[1], [1], [0], [0], [0, 0, 1, 0], [], []>} : vector<8x8xbf16>, vector<8x8xbf16>, vector<8x8xf32> -> vector<8x8xf32>
    %cst_21 = arith.constant 0.353553385 : f32
    %51 = vector.broadcast %cst_21 : f32 to vector<8x8xf32>
    %52 = arith.mulf %50, %51 : vector<8x8xf32>
    %cst_22 = arith.constant dense<0xFF800000> : vector<8xf32>
    %53 = vector.multi_reduction <maximumf>, %52, %cst_22 [1] : vector<8x8xf32> to vector<8xf32>
    %54 = vector.shape_cast %53 : vector<8xf32> to vector<8x1xf32>
    %55 = vector.broadcast %54 : vector<8x1xf32> to vector<8x8xf32>
    %56 = arith.subf %52, %55 : vector<8x8xf32>
    %57 = math.exp %56 : vector<8x8xf32>
    %cst_23 = arith.constant dense<0.000000e+00> : vector<8xf32>
    %58 = vector.multi_reduction <add>, %57, %cst_23 [1] : vector<8x8xf32> to vector<8xf32>
    %59 = vector.shape_cast %58 : vector<8xf32> to vector<8x1xf32>
    %60 = tpu.reciprocal %59 {approx = true} : vector<8x1xf32> -> vector<8x1xf32>
    %61 = vector.broadcast %60 : vector<8x1xf32> to vector<8x8xf32>
    %62 = arith.mulf %57, %61 : vector<8x8xf32>
    %63 = arith.truncf %62 : vector<8x8xf32> to vector<8x8xbf16>
    %64 = vector.extract_strided_slice %23 {offsets = [0, 8], sizes = [8, 8], strides = [1, 1]} : vector<8x32xbf16> to vector<8x8xbf16>
    %cst_24 = arith.constant dense<0.000000e+00> : vector<8x8xf32>
    %65 = tpu.matmul %63, %64, %cst_24 {dimension_numbers = #tpu.dot_dimension_numbers<[1], [0], [0], [1], [0, 0, 1, 1], [], []>} : vector<8x8xbf16>, vector<8x8xbf16>, vector<8x8xf32> -> vector<8x8xf32>
    %66 = arith.truncf %65 : vector<8x8xf32> to vector<8x8xbf16>
    %c1 = arith.constant 1 : index
    %c0_25 = arith.constant 0 : index
    %c0_26 = arith.constant 0 : index
    %67 = vector.load %arg6[%c1, %c0_25, %c0_26] : memref<4x8x32xbf16, #tpu.memory_space<vmem>>, vector<1x8x32xbf16>
    %68 = vector.shape_cast %67 : vector<1x8x32xbf16> to vector<8x32xbf16>
    %cst_27 = arith.constant dense<0.000000e+00> : vector<8x32xf32>
    %69 = tpu.matmul %66, %68, %cst_27 {dimension_numbers = #tpu.dot_dimension_numbers<[1], [0], [0], [1], [0, 0, 1, 1], [], []>} : vector<8x8xbf16>, vector<8x32xbf16>, vector<8x32xf32> -> vector<8x32xf32>
    %70 = arith.addf %47, %69 : vector<8x32xf32>
    %71 = vector.extract_strided_slice %21 {offsets = [0, 16], sizes = [8, 8], strides = [1, 1]} : vector<8x32xbf16> to vector<8x8xbf16>
    %72 = vector.extract_strided_slice %22 {offsets = [0, 16], sizes = [8, 8], strides = [1, 1]} : vector<8x32xbf16> to vector<8x8xbf16>
    %cst_28 = arith.constant dense<0.000000e+00> : vector<8x8xf32>
    %73 = tpu.matmul %71, %72, %cst_28 {dimension_numbers = #tpu.dot_dimension_numbers<[1], [1], [0], [0], [0, 0, 1, 0], [], []>} : vector<8x8xbf16>, vector<8x8xbf16>, vector<8x8xf32> -> vector<8x8xf32>
    %cst_29 = arith.constant 0.353553385 : f32
    %74 = vector.broadcast %cst_29 : f32 to vector<8x8xf32>
    %75 = arith.mulf %73, %74 : vector<8x8xf32>
    %cst_30 = arith.constant dense<0xFF800000> : vector<8xf32>
    %76 = vector.multi_reduction <maximumf>, %75, %cst_30 [1] : vector<8x8xf32> to vector<8xf32>
    %77 = vector.shape_cast %76 : vector<8xf32> to vector<8x1xf32>
    %78 = vector.broadcast %77 : vector<8x1xf32> to vector<8x8xf32>
    %79 = arith.subf %75, %78 : vector<8x8xf32>
    %80 = math.exp %79 : vector<8x8xf32>
    %cst_31 = arith.constant dense<0.000000e+00> : vector<8xf32>
    %81 = vector.multi_reduction <add>, %80, %cst_31 [1] : vector<8x8xf32> to vector<8xf32>
    %82 = vector.shape_cast %81 : vector<8xf32> to vector<8x1xf32>
    %83 = tpu.reciprocal %82 {approx = true} : vector<8x1xf32> -> vector<8x1xf32>
    %84 = vector.broadcast %83 : vector<8x1xf32> to vector<8x8xf32>
    %85 = arith.mulf %80, %84 : vector<8x8xf32>
    %86 = arith.truncf %85 : vector<8x8xf32> to vector<8x8xbf16>
    %87 = vector.extract_strided_slice %23 {offsets = [0, 16], sizes = [8, 8], strides = [1, 1]} : vector<8x32xbf16> to vector<8x8xbf16>
    %cst_32 = arith.constant dense<0.000000e+00> : vector<8x8xf32>
    %88 = tpu.matmul %86, %87, %cst_32 {dimension_numbers = #tpu.dot_dimension_numbers<[1], [0], [0], [1], [0, 0, 1, 1], [], []>} : vector<8x8xbf16>, vector<8x8xbf16>, vector<8x8xf32> -> vector<8x8xf32>
    %89 = arith.truncf %88 : vector<8x8xf32> to vector<8x8xbf16>
    %c2 = arith.constant 2 : index
    %c0_33 = arith.constant 0 : index
    %c0_34 = arith.constant 0 : index
    %90 = vector.load %arg6[%c2, %c0_33, %c0_34] : memref<4x8x32xbf16, #tpu.memory_space<vmem>>, vector<1x8x32xbf16>
    %91 = vector.shape_cast %90 : vector<1x8x32xbf16> to vector<8x32xbf16>
    %cst_35 = arith.constant dense<0.000000e+00> : vector<8x32xf32>
    %92 = tpu.matmul %89, %91, %cst_35 {dimension_numbers = #tpu.dot_dimension_numbers<[1], [0], [0], [1], [0, 0, 1, 1], [], []>} : vector<8x8xbf16>, vector<8x32xbf16>, vector<8x32xf32> -> vector<8x32xf32>
    %93 = arith.addf %70, %92 : vector<8x32xf32>
    %94 = vector.extract_strided_slice %21 {offsets = [0, 24], sizes = [8, 8], strides = [1, 1]} : vector<8x32xbf16> to vector<8x8xbf16>
    %95 = vector.extract_strided_slice %22 {offsets = [0, 24], sizes = [8, 8], strides = [1, 1]} : vector<8x32xbf16> to vector<8x8xbf16>
    %cst_36 = arith.constant dense<0.000000e+00> : vector<8x8xf32>
    %96 = tpu.matmul %94, %95, %cst_36 {dimension_numbers = #tpu.dot_dimension_numbers<[1], [1], [0], [0], [0, 0, 1, 0], [], []>} : vector<8x8xbf16>, vector<8x8xbf16>, vector<8x8xf32> -> vector<8x8xf32>
    %cst_37 = arith.constant 0.353553385 : f32
    %97 = vector.broadcast %cst_37 : f32 to vector<8x8xf32>
    %98 = arith.mulf %96, %97 : vector<8x8xf32>
    %cst_38 = arith.constant dense<0xFF800000> : vector<8xf32>
    %99 = vector.multi_reduction <maximumf>, %98, %cst_38 [1] : vector<8x8xf32> to vector<8xf32>
    %100 = vector.shape_cast %99 : vector<8xf32> to vector<8x1xf32>
    %101 = vector.broadcast %100 : vector<8x1xf32> to vector<8x8xf32>
    %102 = arith.subf %98, %101 : vector<8x8xf32>
    %103 = math.exp %102 : vector<8x8xf32>
    %cst_39 = arith.constant dense<0.000000e+00> : vector<8xf32>
    %104 = vector.multi_reduction <add>, %103, %cst_39 [1] : vector<8x8xf32> to vector<8xf32>
    %105 = vector.shape_cast %104 : vector<8xf32> to vector<8x1xf32>
    %106 = tpu.reciprocal %105 {approx = true} : vector<8x1xf32> -> vector<8x1xf32>
    %107 = vector.broadcast %106 : vector<8x1xf32> to vector<8x8xf32>
    %108 = arith.mulf %103, %107 : vector<8x8xf32>
    %109 = arith.truncf %108 : vector<8x8xf32> to vector<8x8xbf16>
    %110 = vector.extract_strided_slice %23 {offsets = [0, 24], sizes = [8, 8], strides = [1, 1]} : vector<8x32xbf16> to vector<8x8xbf16>
    %cst_40 = arith.constant dense<0.000000e+00> : vector<8x8xf32>
    %111 = tpu.matmul %109, %110, %cst_40 {dimension_numbers = #tpu.dot_dimension_numbers<[1], [0], [0], [1], [0, 0, 1, 1], [], []>} : vector<8x8xbf16>, vector<8x8xbf16>, vector<8x8xf32> -> vector<8x8xf32>
    %112 = arith.truncf %111 : vector<8x8xf32> to vector<8x8xbf16>
    %c3 = arith.constant 3 : index
    %c0_41 = arith.constant 0 : index
    %c0_42 = arith.constant 0 : index
    %113 = vector.load %arg6[%c3, %c0_41, %c0_42] : memref<4x8x32xbf16, #tpu.memory_space<vmem>>, vector<1x8x32xbf16>
    %114 = vector.shape_cast %113 : vector<1x8x32xbf16> to vector<8x32xbf16>
    %cst_43 = arith.constant dense<0.000000e+00> : vector<8x32xf32>
    %115 = tpu.matmul %112, %114, %cst_43 {dimension_numbers = #tpu.dot_dimension_numbers<[1], [0], [0], [1], [0, 0, 1, 1], [], []>} : vector<8x8xbf16>, vector<8x32xbf16>, vector<8x32xf32> -> vector<8x32xf32>
    %116 = arith.addf %93, %115 : vector<8x32xf32>
    %c0_44 = arith.constant 0 : index
    %c0_45 = arith.constant 0 : index
    %117 = vector.load %arg7[%c0_44, %c0_45] : memref<1x32xf32, #tpu.memory_space<vmem>>, vector<1x32xf32>
    %118 = vector.broadcast %117 : vector<1x32xf32> to vector<8x32xf32>
    %119 = arith.addf %116, %118 : vector<8x32xf32>
    %c0_46 = arith.constant 0 : index
    %c0_47 = arith.constant 0 : index
    %c0_48 = arith.constant 0 : index
    %120 = vector.load %arg8[%c0_46, %c0_47, %c0_48] : memref<1x8x32xf32, #tpu.memory_space<vmem>>, vector<1x8x32xf32>
    %121 = vector.shape_cast %120 : vector<1x8x32xf32> to vector<8x32xf32>
    %122 = vector.shape_cast %119 : vector<8x32xf32> to vector<1x8x32xf32>
    tpu.vector_store %arg8[%c0_46, %c0_47, %c0_48], %122 {strides = array<i32>} : memref<1x8x32xf32, #tpu.memory_space<vmem>>, vector<1x8x32xf32>,
    return
  }
  func.func @transform_0(%arg0: i32) -> (i32, i32, i32) {
    %c0_i32 = arith.constant 0 : i32
    %c0_i32_0 = arith.constant 0 : i32
    %c0_i32_1 = arith.constant 0 : i32
    return %arg0, %c0_i32, %c0_i32_0 : i32, i32, i32
  }
  func.func @transform_1(%arg0: i32) -> (i32, i32) {
    %c0_i32 = arith.constant 0 : i32
    %c0_i32_0 = arith.constant 0 : i32
    %c0_i32_1 = arith.constant 0 : i32
    return %c0_i32, %c0_i32_0 : i32, i32
  }
  func.func @transform_2(%arg0: i32) -> (i32, i32) {
    %c0_i32 = arith.constant 0 : i32
    %c0_i32_0 = arith.constant 0 : i32
    %c0_i32_1 = arith.constant 0 : i32
    return %c0_i32, %c0_i32_0 : i32, i32
  }
  func.func @transform_3(%arg0: i32) -> (i32, i32) {
    %c0_i32 = arith.constant 0 : i32
    %c0_i32_0 = arith.constant 0 : i32
    %c0_i32_1 = arith.constant 0 : i32
    return %c0_i32, %c0_i32_0 : i32, i32
  }
  func.func @transform_4(%arg0: i32) -> (i32, i32) {
    %c0_i32 = arith.constant 0 : i32
    %c0_i32_0 = arith.constant 0 : i32
    %c0_i32_1 = arith.constant 0 : i32
    return %c0_i32, %c0_i32_0 : i32, i32
  }
  func.func @transform_5(%arg0: i32) -> (i32, i32, i32) {
    %c0_i32 = arith.constant 0 : i32
    %c0_i32_0 = arith.constant 0 : i32
    %c0_i32_1 = arith.constant 0 : i32
    %c0_i32_2 = arith.constant 0 : i32
    return %c0_i32, %c0_i32_0, %c0_i32_1 : i32, i32, i32
  }
  func.func @transform_6(%arg0: i32) -> (i32, i32) {
    %c0_i32 = arith.constant 0 : i32
    %c0_i32_0 = arith.constant 0 : i32
    %c0_i32_1 = arith.constant 0 : i32
    return %c0_i32, %c0_i32_0 : i32, i32
  }
  func.func @transform_7(%arg0: i32) -> (i32, i32, i32) {
    %c0_i32 = arith.constant 0 : i32
    %c0_i32_0 = arith.constant 0 : i32
    %c0_i32_1 = arith.constant 0 : i32
    return %arg0, %c0_i32, %c0_i32_0 : i32, i32, i32
  }
}

module attributes {stable_mosaic.version = 11 : i64} {
  func.func @_mha_rotary_kernel(%arg0: i32, %arg1: memref<1x8x32xf32, #tpu.memory_space<vmem>>, %arg2: memref<32x160xbf16, #tpu.memory_space<vmem>>, %arg3: memref<1x160xf32, #tpu.memory_space<vmem>>, %arg4: memref<8x32xf32, #tpu.memory_space<vmem>>, %arg5: memref<8x32xf32, #tpu.memory_space<vmem>>, %arg6: memref<4x8x32xbf16, #tpu.memory_space<vmem>>, %arg7: memref<1x32xf32, #tpu.memory_space<vmem>>, %arg8: memref<1x8x32xf32, #tpu.memory_space<vmem>>) attributes {dimension_semantics = [#tpu.dimension_semantics<parallel>], iteration_bounds = array<i64: 2>, scalar_prefetch = 0 : i64, scratch_operands = 0 : i64, tpu.core_type = #tpu.core_type<tc>, window_params = [{transform_indices = @transform_0, window_bounds = array<i64: 1, 8, 32>}, {pipeline_mode = #tpu.pipeline_mode<synchronous>, transform_indices = @transform_1, window_bounds = array<i64: 32, 160>}, {pipeline_mode = #tpu.pipeline_mode<synchronous>, transform_indices = @transform_2, window_bounds = array<i64: 1, 160>}, {pipeline_mode = #tpu.pipeline_mode<synchronous>, transform_indices = @transform_3, window_bounds = array<i64: 8, 32>}, {pipeline_mode = #tpu.pipeline_mode<synchronous>, transform_indices = @transform_4, window_bounds = array<i64: 8, 32>}, {pipeline_mode = #tpu.pipeline_mode<synchronous>, transform_indices = @transform_5, window_bounds = array<i64: 4, 8, 32>}, {pipeline_mode = #tpu.pipeline_mode<synchronous>, transform_indices = @transform_6, window_bounds = array<i64: 1, 32>}, {transform_indices = @transform_7, window_bounds = array<i64: 1, 8, 32>}]} {
    %c0 = arith.constant 0 : index
    %c0_0 = arith.constant 0 : index
    %c0_1 = arith.constant 0 : index
    %0 = vector.load %arg1[%c0, %c0_0, %c0_1] : memref<1x8x32xf32, #tpu.memory_space<vmem>>, vector<1x8x32xf32>
    %1 = vector.shape_cast %0 : vector<1x8x32xf32> to vector<8x32xf32>
    %2 = arith.truncf %1 : vector<8x32xf32> to vector<8x32xbf16>
    %c0_2 = arith.constant 0 : index
    %c0_3 = arith.constant 0 : index
    %3 = vector.load %arg2[%c0_2, %c0_3] : memref<32x160xbf16, #tpu.memory_space<vmem>>, vector<32x160xbf16>
    %cst = arith.constant dense<0.000000e+00> : vector<8x160xf32>
    %4 = tpu.matmul %2, %3, %cst {dimension_numbers = #tpu.dot_dimension_numbers<[1], [0], [0], [1], [0, 0, 1, 1], [], []>} : vector<8x32xbf16>, vector<32x160xbf16>, vector<8x160xf32> -> vector<8x160xf32>
    %c0_4 = arith.constant 0 : index
    %c0_5 = arith.constant 0 : index
    %5 = vector.load %arg3[%c0_4, %c0_5] : memref<1x160xf32, #tpu.memory_space<vmem>>, vector<1x160xf32>
    %6 = vector.broadcast %5 : vector<1x160xf32> to vector<8x160xf32>
    %7 = arith.addf %4, %6 : vector<8x160xf32>
    %c0_6 = arith.constant 0 : index
    %c0_7 = arith.constant 0 : index
    %8 = vector.load %arg4[%c0_6, %c0_7] : memref<8x32xf32, #tpu.memory_space<vmem>>, vector<8x32xf32>
    %c0_8 = arith.constant 0 : index
    %c0_9 = arith.constant 0 : index
    %9 = vector.load %arg5[%c0_8, %c0_9] : memref<8x32xf32, #tpu.memory_space<vmem>>, vector<8x32xf32>
    %10 = vector.extract_strided_slice %7 {offsets = [0, 0], sizes = [8, 32], strides = [1, 1]} : vector<8x160xf32> to vector<8x32xf32>
    %11 = arith.mulf %10, %8 : vector<8x32xf32>
    %12 = vector.extract_strided_slice %7 {offsets = [0, 96], sizes = [8, 32], strides = [1, 1]} : vector<8x160xf32> to vector<8x32xf32>
    %13 = arith.mulf %12, %9 : vector<8x32xf32>
    %14 = arith.addf %11, %13 : vector<8x32xf32>
    %15 = vector.extract_strided_slice %7 {offsets = [0, 32], sizes = [8, 32], strides = [1, 1]} : vector<8x160xf32> to vector<8x32xf32>
    %16 = arith.mulf %15, %8 : vector<8x32xf32>
    %17 = vector.extract_strided_slice %7 {offsets = [0, 128], sizes = [8, 32], strides = [1, 1]} : vector<8x160xf32> to vector<8x32xf32>
    %18 = arith.mulf %17, %9 : vector<8x32xf32>
    %19 = arith.addf %16, %18 : vector<8x32xf32>
    %20 = vector.extract_strided_slice %7 {offsets = [0, 64], sizes = [8, 32], strides = [1, 1]} : vector<8x160xf32> to vector<8x32xf32>
    %21 = arith.truncf %14 : vector<8x32xf32> to vector<8x32xbf16>
    %22 = arith.truncf %19 : vector<8x32xf32> to vector<8x32xbf16>
    %23 = arith.truncf %20 : vector<8x32xf32> to vector<8x32xbf16>
    %cst_10 = arith.constant 0.000000e+00 : f32
    %24 = vector.broadcast %cst_10 : f32 to vector<8x32xf32>
    %25 = vector.extract_strided_slice %21 {offsets = [0, 0], sizes = [8, 8], strides = [1, 1]} : vector<8x32xbf16> to vector<8x8xbf16>
    %26 = vector.extract_strided_slice %22 {offsets = [0, 0], sizes = [8, 8], strides = [1, 1]} : vector<8x32xbf16> to vector<8x8xbf16>
    %cst_11 = arith.constant dense<0.000000e+00> : vector<8x8xf32>
    %27 = tpu.matmul %25, %26, %cst_11 {dimension_numbers = #tpu.dot_dimension_numbers<[1], [1], [0], [0], [0, 0, 1, 0], [], []>} : vector<8x8xbf16>, vector<8x8xbf16>, vector<8x8xf32> -> vector<8x8xf32>
    %cst_12 = arith.constant 0.353553385 : f32
    %28 = vector.broadcast %cst_12 : f32 to vector<8x8xf32>
    %29 = arith.mulf %27, %28 : vector<8x8xf32>
    %cst_13 = arith.constant dense<0xFF800000> : vector<8xf32>
    %30 = vector.multi_reduction <maximumf>, %29, %cst_13 [1] : vector<8x8xf32> to vector<8xf32>
    %31 = vector.shape_cast %30 : vector<8xf32> to vector<8x1xf32>
    %32 = vector.broadcast %31 : vector<8x1xf32> to vector<8x8xf32>
    %33 = arith.subf %29, %32 : vector<8x8xf32>
    %34 = math.exp %33 : vector<8x8xf32>
    %cst_14 = arith.constant dense<0.000000e+00> : vector<8xf32>
    %35 = vector.multi_reduction <add>, %34, %cst_14 [1] : vector<8x8xf32> to vector<8xf32>
    %36 = vector.shape_cast %35 : vector<8xf32> to vector<8x1xf32>
    %37 = tpu.reciprocal %36 {approx = true} : vector<8x1xf32> -> vector<8x1xf32>
    %38 = vector.broadcast %37 : vector<8x1xf32> to vector<8x8xf32>
    %39 = arith.mulf %34, %38 : vector<8x8xf32>
    %40 = arith.truncf %39 : vector<8x8xf32> to vector<8x8xbf16>
    %41 = vector.extract_strided_slice %23 {offsets = [0, 0], sizes = [8, 8], strides = [1, 1]} : vector<8x32xbf16> to vector<8x8xbf16>
    %cst_15 = arith.constant dense<0.000000e+00> : vector<8x8xf32>
    %42 = tpu.matmul %40, %41, %cst_15 {dimension_numbers = #tpu.dot_dimension_numbers<[1], [0], [0], [1], [0, 0, 1, 1], [], []>} : vector<8x8xbf16>, vector<8x8xbf16>, vector<8x8xf32> -> vector<8x8xf32>
    %43 = arith.truncf %42 : vector<8x8xf32> to vector<8x8xbf16>
    %c0_16 = arith.constant 0 : index
    %c0_17 = arith.constant 0 : index
    %c0_18 = arith.constant 0 : index
    %44 = vector.load %arg6[%c0_16, %c0_17, %c0_18] : memref<4x8x32xbf16, #tpu.memory_space<vmem>>, vector<1x8x32xbf16>
    %45 = vector.shape_cast %44 : vector<1x8x32xbf16> to vector<8x32xbf16>
    %cst_19 = arith.constant dense<0.000000e+00> : vector<8x32xf32>
    %46 = tpu.matmul %43, %45, %cst_19 {dimension_numbers = #tpu.dot_dimension_numbers<[1], [0], [0], [1], [0, 0, 1, 1], [], []>} : vector<8x8xbf16>, vector<8x32xbf16>, vector<8x32xf32> -> vector<8x32xf32>
    %47 = arith.addf %24, %46 : vector<8x32xf32>
    %48 = vector.extract_strided_slice %21 {offsets = [0, 8], sizes = [8, 8], strides = [1, 1]} : vector<8x32xbf16> to vector<8x8xbf16>
    %49 = vector.extract_strided_slice %22 {offsets = [0, 8], sizes = [8, 8], strides = [1, 1]} : vector<8x32xbf16> to vector<8x8xbf16>
    %cst_20 = arith.constant dense<0.000000e+00> : vector<8x8xf32>
    %50 = tpu.matmul %48, %49, %cst_20 {dimension_numbers = #tpu.dot_dimension_numbers<[1], [1], [0], [0], [0, 0, 1, 0], [], []>} : vector<8x8xbf16>, vector<8x8xbf16>, vector<8x8xf32> -> vector<8x8xf32>
    %cst_21 = arith.constant 0.353553385 : f32
    %51 = vector.broadcast %cst_21 : f32 to vector<8x8xf32>
    %52 = arith.mulf %50, %51 : vector<8x8xf32>
    %cst_22 = arith.constant dense<0xFF800000> : vector<8xf32>
    %53 = vector.multi_reduction <maximumf>, %52, %cst_22 [1] : vector<8x8xf32> to vector<8xf32>
    %54 = vector.shape_cast %53 : vector<8xf32> to vector<8x1xf32>
    %55 = vector.broadcast %54 : vector<8x1xf32> to vector<8x8xf32>
    %56 = arith.subf %52, %55 : vector<8x8xf32>
    %57 = math.exp %56 : vector<8x8xf32>
    %cst_23 = arith.constant dense<0.000000e+00> : vector<8xf32>
    %58 = vector.multi_reduction <add>, %57, %cst_23 [1] : vector<8x8xf32> to vector<8xf32>
    %59 = vector.shape_cast %58 : vector<8xf32> to vector<8x1xf32>
    %60 = tpu.reciprocal %59 {approx = true} : vector<8x1xf32> -> vector<8x1xf32>
    %61 = vector.broadcast %60 : vector<8x1xf32> to vector<8x8xf32>
    %62 = arith.mulf %57, %61 : vector<8x8xf32>
    %63 = arith.truncf %62 : vector<8x8xf32> to vector<8x8xbf16>
    %64 = vector.extract_strided_slice %23 {offsets = [0, 8], sizes = [8, 8], strides = [1, 1]} : vector<8x32xbf16> to vector<8x8xbf16>
    %cst_24 = arith.constant dense<0.000000e+00> : vector<8x8xf32>
    %65 = tpu.matmul %63, %64, %cst_24 {dimension_numbers = #tpu.dot_dimension_numbers<[1], [0], [0], [1], [0, 0, 1, 1], [], []>} : vector<8x8xbf16>, vector<8x8xbf16>, vector<8x8xf32> -> vector<8x8xf32>
    %66 = arith.truncf %65 : vector<8x8xf32> to vector<8x8xbf16>
    %c1 = arith.constant 1 : index
    %c0_25 = arith.constant 0 : index
    %c0_26 = arith.constant 0 : index
    %67 = vector.load %arg6[%c1, %c0_25, %c0_26] : memref<4x8x32xbf16, #tpu.memory_space<vmem>>, vector<1x8x32xbf16>
    %68 = vector.shape_cast %67 : vector<1x8x32xbf16> to vector<8x32xbf16>
    %cst_27 = arith.constant dense<0.000000e+00> : vector<8x32xf32>
    %69 = tpu.matmul %66, %68, %cst_27 {dimension_numbers = #tpu.dot_dimension_numbers<[1], [0], [0], [1], [0, 0, 1, 1], [], []>} : vector<8x8xbf16>, vector<8x32xbf16>, vector<8x32xf32> -> vector<8x32xf32>
    %70 = arith.addf %47, %69 : vector<8x32xf32>
    %71 = vector.extract_strided_slice %21 {offsets = [0, 16], sizes = [8, 8], strides = [1, 1]} : vector<8x32xbf16> to vector<8x8xbf16>
    %72 = vector.extract_strided_slice %22 {offsets = [0, 16], sizes = [8, 8], strides = [1, 1]} : vector<8x32xbf16> to vector<8x8xbf16>
    %cst_28 = arith.constant dense<0.000000e+00> : vector<8x8xf32>
    %73 = tpu.matmul %71, %72, %cst_28 {dimension_numbers = #tpu.dot_dimension_numbers<[1], [1], [0], [0], [0, 0, 1, 0], [], []>} : vector<8x8xbf16>, vector<8x8xbf16>, vector<8x8xf32> -> vector<8x8xf32>
    %cst_29 = arith.constant 0.353553385 : f32
    %74 = vector.broadcast %cst_29 : f32 to vector<8x8xf32>
    %75 = arith.mulf %73, %74 : vector<8x8xf32>
    %cst_30 = arith.constant dense<0xFF800000> : vector<8xf32>
    %76 = vector.multi_reduction <maximumf>, %75, %cst_30 [1] : vector<8x8xf32> to vector<8xf32>
    %77 = vector.shape_cast %76 : vector<8xf32> to vector<8x1xf32>
    %78 = vector.broadcast %77 : vector<8x1xf32> to vector<8x8xf32>
    %79 = arith.subf %75, %78 : vector<8x8xf32>
    %80 = math.exp %79 : vector<8x8xf32>
    %cst_31 = arith.constant dense<0.000000e+00> : vector<8xf32>
    %81 = vector.multi_reduction <add>, %80, %cst_31 [1] : vector<8x8xf32> to vector<8xf32>
    %82 = vector.shape_cast %81 : vector<8xf32> to vector<8x1xf32>
    %83 = tpu.reciprocal %82 {approx = true} : vector<8x1xf32> -> vector<8x1xf32>
    %84 = vector.broadcast %83 : vector<8x1xf32> to vector<8x8xf32>
    %85 = arith.mulf %80, %84 : vector<8x8xf32>
    %86 = arith.truncf %85 : vector<8x8xf32> to vector<8x8xbf16>
    %87 = vector.extract_strided_slice %23 {offsets = [0, 16], sizes = [8, 8], strides = [1, 1]} : vector<8x32xbf16> to vector<8x8xbf16>
    %cst_32 = arith.constant dense<0.000000e+00> : vector<8x8xf32>
    %88 = tpu.matmul %86, %87, %cst_32 {dimension_numbers = #tpu.dot_dimension_numbers<[1], [0], [0], [1], [0, 0, 1, 1], [], []>} : vector<8x8xbf16>, vector<8x8xbf16>, vector<8x8xf32> -> vector<8x8xf32>
    %89 = arith.truncf %88 : vector<8x8xf32> to vector<8x8xbf16>
    %c2 = arith.constant 2 : index
    %c0_33 = arith.constant 0 : index
    %c0_34 = arith.constant 0 : index
    %90 = vector.load %arg6[%c2, %c0_33, %c0_34] : memref<4x8x32xbf16, #tpu.memory_space<vmem>>, vector<1x8x32xbf16>
    %91 = vector.shape_cast %90 : vector<1x8x32xbf16> to vector<8x32xbf16>
    %cst_35 = arith.constant dense<0.000000e+00> : vector<8x32xf32>
    %92 = tpu.matmul %89, %91, %cst_35 {dimension_numbers = #tpu.dot_dimension_numbers<[1], [0], [0], [1], [0, 0, 1, 1], [], []>} : vector<8x8xbf16>, vector<8x32xbf16>, vector<8x32xf32> -> vector<8x32xf32>
    %93 = arith.addf %70, %92 : vector<8x32xf32>
    %94 = vector.extract_strided_slice %21 {offsets = [0, 24], sizes = [8, 8], strides = [1, 1]} : vector<8x32xbf16> to vector<8x8xbf16>
    %95 = vector.extract_strided_slice %22 {offsets = [0, 24], sizes = [8, 8], strides = [1, 1]} : vector<8x32xbf16> to vector<8x8xbf16>
    %cst_36 = arith.constant dense<0.000000e+00> : vector<8x8xf32>
    %96 = tpu.matmul %94, %95, %cst_36 {dimension_numbers = #tpu.dot_dimension_numbers<[1], [1], [0], [0], [0, 0, 1, 0], [], []>} : vector<8x8xbf16>, vector<8x8xbf16>, vector<8x8xf32> -> vector<8x8xf32>
    %cst_37 = arith.constant 0.353553385 : f32
    %97 = vector.broadcast %cst_37 : f32 to vector<8x8xf32>
    %98 = arith.mulf %96, %97 : vector<8x8xf32>
    %cst_38 = arith.constant dense<0xFF800000> : vector<8xf32>
    %99 = vector.multi_reduction <maximumf>, %98, %cst_38 [1] : vector<8x8xf32> to vector<8xf32>
    %100 = vector.shape_cast %99 : vector<8xf32> to vector<8x1xf32>
    %101 = vector.broadcast %100 : vector<8x1xf32> to vector<8x8xf32>
    %102 = arith.subf %98, %101 : vector<8x8xf32>
    %103 = math.exp %102 : vector<8x8xf32>
    %cst_39 = arith.constant dense<0.000000e+00> : vector<8xf32>
    %104 = vector.multi_reduction <add>, %103, %cst_39 [1] : vector<8x8xf32> to vector<8xf32>
    %105 = vector.shape_cast %104 : vector<8xf32> to vector<8x1xf32>
    %106 = tpu.reciprocal %105 {approx = true} : vector<8x1xf32> -> vector<8x1xf32>
    %107 = vector.broadcast %106 : vector<8x1xf32> to vector<8x8xf32>
    %108 = arith.mulf %103, %107 : vector<8x8xf32>
    %109 = arith.truncf %108 : vector<8x8xf32> to vector<8x8xbf16>
    %110 = vector.extract_strided_slice %23 {offsets = [0, 24], sizes = [8, 8], strides = [1, 1]} : vector<8x32xbf16> to vector<8x8xbf16>
    %cst_40 = arith.constant dense<0.000000e+00> : vector<8x8xf32>
    %111 = tpu.matmul %109, %110, %cst_40 {dimension_numbers = #tpu.dot_dimension_numbers<[1], [0], [0], [1], [0, 0, 1, 1], [], []>} : vector<8x8xbf16>, vector<8x8xbf16>, vector<8x8xf32> -> vector<8x8xf32>
    %112 = arith.truncf %111 : vector<8x8xf32> to vector<8x8xbf16>
    %c3 = arith.constant 3 : index
    %c0_41 = arith.constant 0 : index
    %c0_42 = arith.constant 0 : index
    %113 = vector.load %arg6[%c3, %c0_41, %c0_42] : memref<4x8x32xbf16, #tpu.memory_space<vmem>>, vector<1x8x32xbf16>
    %114 = vector.shape_cast %113 : vector<1x8x32xbf16> to vector<8x32xbf16>
    %cst_43 = arith.constant dense<0.000000e+00> : vector<8x32xf32>
    %115 = tpu.matmul %112, %114, %cst_43 {dimension_numbers = #tpu.dot_dimension_numbers<[1], [0], [0], [1], [0, 0, 1, 1], [], []>} : vector<8x8xbf16>, vector<8x32xbf16>, vector<8x32xf32> -> vector<8x32xf32>
    %116 = arith.addf %93, %115 : vector<8x32xf32>
    %c0_44 = arith.constant 0 : index
    %c0_45 = arith.constant 0 : index
    %117 = vector.load %arg7[%c0_44, %c0_45] : memref<1x32xf32, #tpu.memory_space<vmem>>, vector<1x32xf32>
    %118 = vector.broadcast %117 : vector<1x32xf32> to vector<8x32xf32>
    %119 = arith.addf %116, %118 : vector<8x32xf32>
    %c0_46 = arith.constant 0 : index
    %c0_47 = arith.constant 0 : index
    %c0_48 = arith.constant 0 : index
    %120 = vector.load %arg8[%c0_46, %c0_47, %c0_48] : memref<1x8x32xf32, #tpu.memory_space<vmem>>, vector<1x8x32xf32>
    %121 = vector.shape_cast %120 : vector<1x8x32xf32> to vector<8x32xf32>
    %122 = vector.shape_cast %119 : vector<8x32xf32> to vector<1x8x32xf32>
    tpu.vector_store %arg8[%c0_46, %c0_47, %c0_48], %122 {strides = array<i32>} : memref<1x8x32xf32, #tpu.memory_space<vmem>>, vector<1x8x32xf32>,
    return
  }
  func.func @transform_0(%arg0: i32) -> (i32, i32, i32) {
    %c0_i32 = arith.constant 0 : i32
    %c0_i32_0 = arith.constant 0 : i32
    %c0_i32_1 = arith.constant 0 : i32
    return %arg0, %c0_i32, %c0_i32_0 : i32, i32, i32
  }
  func.func @transform_1(%arg0: i32) -> (i32, i32) {
    %c0_i32 = arith.constant 0 : i32
    %c0_i32_0 = arith.constant 0 : i32
    %c0_i32_1 = arith.constant 0 : i32
    return %c0_i32, %c0_i32_0 : i32, i32
  }
  func.func @transform_2(%arg0: i32) -> (i32, i32) {
    %c0_i32 = arith.constant 0 : i32
    %c0_i32_0 = arith.constant 0 : i32
    %c0_i32_1 = arith.constant 0 : i32
    return %c0_i32, %c0_i32_0 : i32, i32
  }
  func.func @transform_3(%arg0: i32) -> (i32, i32) {
    %c0_i32 = arith.constant 0 : i32
    %c0_i32_0 = arith.constant 0 : i32
    %c0_i32_1 = arith.constant 0 : i32
    return %c0_i32, %c0_i32_0 : i32, i32
  }
  func.func @transform_4(%arg0: i32) -> (i32, i32) {
    %c0_i32 = arith.constant 0 : i32
    %c0_i32_0 = arith.constant 0 : i32
    %c0_i32_1 = arith.constant 0 : i32
    return %c0_i32, %c0_i32_0 : i32, i32
  }
  func.func @transform_5(%arg0: i32) -> (i32, i32, i32) {
    %c0_i32 = arith.constant 0 : i32
    %c0_i32_0 = arith.constant 0 : i32
    %c0_i32_1 = arith.constant 0 : i32
    %c0_i32_2 = arith.constant 0 : i32
    return %c0_i32, %c0_i32_0, %c0_i32_1 : i32, i32, i32
  }
  func.func @transform_6(%arg0: i32) -> (i32, i32) {
    %c0_i32 = arith.constant 0 : i32
    %c0_i32_0 = arith.constant 0 : i32
    %c0_i32_1 = arith.constant 0 : i32
    return %c0_i32, %c0_i32_0 : i32, i32
  }
  func.func @transform_7(%arg0: i32) -> (i32, i32, i32) {
    %c0_i32 = arith.constant 0 : i32
    %c0_i32_0 = arith.constant 0 : i32
    %c0_i32_1 = arith.constant 0 : i32
    return %arg0, %c0_i32, %c0_i32_0 : i32, i32, i32
  }
}

</mosaic_0001>

<llo_original>
// kernel: tpu_custom_call.1
$region0: #{tpu_custom_call.1}
  #allocation0 [shape = 'u32[]', space=smem, size = 0x4, offset = 0x4, fixed_abs, tag = 'smem constant byte address 0x4 - core index']
  #allocation1 [shape = 'u32[72,128]{1,0:T(1,128)}', space=vmem, size = 0x9000, scoped, tag = 'internal scratch']
  %s0 = inlined_call_operand.hbm [shape: f32[2,8,32], index: 0, kind: input, shape index: {}]
  %s1 = inlined_call_operand.hbm [shape: bf16[32,160], index: 1, kind: input, shape index: {}]
  %s2 = inlined_call_operand.hbm [shape: f32[1,160], index: 2, kind: input, shape index: {}]
  %s3 = inlined_call_operand.hbm [shape: f32[8,32], index: 3, kind: input, shape index: {}]
  %s4 = inlined_call_operand.hbm [shape: f32[8,32], index: 4, kind: input, shape index: {}]
  %s5 = inlined_call_operand.hbm [shape: bf16[4,8,32], index: 5, kind: input, shape index: {}]
  %s6 = inlined_call_operand.vmem [shape: f32[1,32], index: 6, kind: input, shape index: {}]
  %s7 = inlined_call_operand.hbm [shape: f32[2,8,32], index: 7, kind: output, shape index: {}]
  %s8 = sld [smem:[#allocation0]]
  $region85: #{tpu_custom_call.1} parent=0
    _
  %s10 = ssub.s32 1, %s8
  %s11 = scalar_select 0, %s10, %s8
  $region1: #{tpu_custom_call.1} parent=0
    #allocation2 [shape = 'u8[8192]{0}', space=vmem, size = 0x2000, scoped, tag = 'input window, operand 0']
    #allocation3 [shape = 's32[2]{0}', space=sflag, size = 0x8, scoped, tag = 'scoped memory for tpu_custom_call.1']
    #allocation4 [shape = 's32[2]{0}', space=sflag, size = 0x8, scoped, tag = 'scoped memory for tpu_custom_call.1']
    #allocation5 [shape = 'u8[16384]{0}', space=vmem, size = 0x4000, scoped, tag = 'input window, operand 1, single buffered']
    #allocation6 [shape = 's32[1]{0}', space=sflag, size = 0x4, scoped, tag = 'scoped memory for tpu_custom_call.1']
    #allocation7 [shape = 'u8[1024]{0}', space=vmem, size = 0x400, scoped, tag = 'input window, operand 2, single buffered']
    #allocation8 [shape = 'u8[4096]{0}', space=vmem, size = 0x1000, scoped, tag = 'input window, operand 3, single buffered']
    #allocation9 [shape = 's32[1]{0}', space=sflag, size = 0x4, scoped, tag = 'scoped memory for tpu_custom_call.1']
    #allocation10 [shape = 'u8[4096]{0}', space=vmem, size = 0x1000, scoped, tag = 'input window, operand 4, single buffered']
    #allocation11 [shape = 'u8[8192]{0}', space=vmem, size = 0x2000, scoped, tag = 'input window, operand 5, single buffered']
    #allocation12 [shape = 's32[1]{0}', space=sflag, size = 0x4, scoped, tag = 'scoped memory for tpu_custom_call.1']
    #allocation13 [shape = 'u8[8192]{0}', space=vmem, size = 0x2000, scoped, tag = 'output window, operand 0']
    %12 = vsyncpa [#allocation3], 0
    %s13 = scalar_lea.sflag [#allocation3], 1
    %14 = vsyncpa %s13, 0
    %15 = vsyncpa [#allocation6], 0
    %16 = vsyncpa [#allocation9], 0
    %17 = vsyncpa [#allocation12], 0
    %18 = vsyncpa [#allocation4], 0
    %s19 = scalar_lea.sflag [#allocation4], 1
    %20 = vsyncpa %s19, 0
    loop: start=0, step=1, limit=4
    $region2: #{tpu_custom_call.1} parent=1 // loop_pre_header
      _
    $region3: #{tpu_custom_call.1} parent=1 // loop_header
      %s22 = sphi 0, %s26
      %p23 = scmp.ge.s32.totalorder %s22, 4
      %s32 = sphi 0, %s34
      %s35 = sphi 0, %s32
      %s36 = sphi 0, %s35
      %s52 = sphi 0, %s36
      %s56 = sphi 0, %s56
      %s58 = sphi 0, %s56
      %s59 = sphi 0, %s58
      %s73 = sphi 0, %s59
      %s77 = sphi 0, %s77
      %s79 = sphi 0, %s77
      %s80 = sphi 0, %s79
      %s94 = sphi 0, %s80
      %s98 = sphi 0, %s98
      %s100 = sphi 0, %s98
      %s101 = sphi 0, %s100
      %s115 = sphi 0, %s101
      %s119 = sphi 0, %s119
      %s121 = sphi 0, %s119
      %s122 = sphi 0, %s121
      %s136 = sphi 0, %s122
      %s140 = sphi 0, %s140
      %s142 = sphi 0, %s140
      %s143 = sphi 0, %s142
      %s157 = sphi 0, %s143
      %s161 = sphi 0, %s161
      %s163 = sphi 0, %s161
      %s164 = sphi 0, %s163
      %s178 = sphi 0, %s164
      %s184 = sphi 0, %s186
      %s187 = sphi 0, %s184
      %s188 = sphi 0, %s187
      %s204 = sphi 0, %s188
    $region4: #{tpu_custom_call.1} parent=1 // loop_header_branch
      %25 = sbr.rel (%p23) target = $region8
    $region5: #{tpu_custom_call.1} parent=1 // loop_body
      %s27 = ssub.s32 %s22, 1
      %s28 = ssub.s32 %s22, 2
      %s29 = sadd.s32 %s22, 1
      %s30 = ssub.s32 %s22, %s29
      %p31 = scmp.eq.s32.totalorder %s30, 0
      %s33 = sadd.s32 %s32, 1
      %s34 = scalar_select %p31, %s32, %s33
      %p37 = pneg %p31
      %p38 = scmp.eq.s32.totalorder %s22, 1
      %p39 = por %p37, %p38
      %p40 = scmp.ne.s32.totalorder %s32, %s35
      %p41 = scmp.eq.s32.totalorder %s22, 0
      %p42 = por %p40, %p41
      %p43 = scmp.ne.s32.totalorder %s32, %s35
      %p44 = scmp.eq.s32.totalorder %s27, 1
      %p45 = por %p43, %p44
      %p46 = scmp.ne.s32.totalorder %s35, %s36
      %p47 = scmp.eq.s32.totalorder %s27, 0
      %p48 = por %p46, %p47
      %p49 = scmp.ne.s32.totalorder %s35, %s36
      %p50 = scmp.eq.s32.totalorder %s28, 1
      %p51 = por %p49, %p50
      %p53 = scmp.ne.s32.totalorder %s36, %s52
      %p54 = scmp.eq.s32.totalorder %s28, 0
      %p55 = por %p53, %p54
      %s57 = sadd.s32 %s56, 1
      %p60 = scmp.eq.s32.totalorder %s22, 1
      %p61 = scmp.ne.s32.totalorder %s56, %s58
      %p62 = scmp.eq.s32.totalorder %s22, 0
      %p63 = por %p61, %p62
      %p64 = scmp.ne.s32.totalorder %s56, %s58
      %p65 = scmp.eq.s32.totalorder %s27, 1
      %p66 = por %p64, %p65
      %p67 = scmp.ne.s32.totalorder %s58, %s59
      %p68 = scmp.eq.s32.totalorder %s27, 0
      %p69 = por %p67, %p68
      %p70 = scmp.ne.s32.totalorder %s58, %s59
      %p71 = scmp.eq.s32.totalorder %s28, 1
      %p72 = por %p70, %p71
      %p74 = scmp.ne.s32.totalorder %s59, %s73
      %p75 = scmp.eq.s32.totalorder %s28, 0
      %p76 = por %p74, %p75
      %s78 = sadd.s32 %s77, 1
      %p81 = scmp.eq.s32.totalorder %s22, 1
      %p82 = scmp.ne.s32.totalorder %s77, %s79
      %p83 = scmp.eq.s32.totalorder %s22, 0
      %p84 = por %p82, %p83
      %p85 = scmp.ne.s32.totalorder %s77, %s79
      %p86 = scmp.eq.s32.totalorder %s27, 1
      %p87 = por %p85, %p86
      %p88 = scmp.ne.s32.totalorder %s79, %s80
      %p89 = scmp.eq.s32.totalorder %s27, 0
      %p90 = por %p88, %p89
      %p91 = scmp.ne.s32.totalorder %s79, %s80
      %p92 = scmp.eq.s32.totalorder %s28, 1
      %p93 = por %p91, %p92
      %p95 = scmp.ne.s32.totalorder %s80, %s94
      %p96 = scmp.eq.s32.totalorder %s28, 0
      %p97 = por %p95, %p96
      %s99 = sadd.s32 %s98, 1
      %p102 = scmp.eq.s32.totalorder %s22, 1
      %p103 = scmp.ne.s32.totalorder %s98, %s100
      %p104 = scmp.eq.s32.totalorder %s22, 0
      %p105 = por %p103, %p104
      %p106 = scmp.ne.s32.totalorder %s98, %s100
      %p107 = scmp.eq.s32.totalorder %s27, 1
      %p108 = por %p106, %p107
      %p109 = scmp.ne.s32.totalorder %s100, %s101
      %p110 = scmp.eq.s32.totalorder %s27, 0
      %p111 = por %p109, %p110
      %p112 = scmp.ne.s32.totalorder %s100, %s101
      %p113 = scmp.eq.s32.totalorder %s28, 1
      %p114 = por %p112, %p113
      %p116 = scmp.ne.s32.totalorder %s101, %s115
      %p117 = scmp.eq.s32.totalorder %s28, 0
      %p118 = por %p116, %p117
      %s120 = sadd.s32 %s119, 1
      %p123 = scmp.eq.s32.totalorder %s22, 1
      %p124 = scmp.ne.s32.totalorder %s119, %s121
      %p125 = scmp.eq.s32.totalorder %s22, 0
      %p126 = por %p124, %p125
      %p127 = scmp.ne.s32.totalorder %s119, %s121
      %p128 = scmp.eq.s32.totalorder %s27, 1
      %p129 = por %p127, %p128
      %p130 = scmp.ne.s32.totalorder %s121, %s122
      %p131 = scmp.eq.s32.totalorder %s27, 0
      %p132 = por %p130, %p131
      %p133 = scmp.ne.s32.totalorder %s121, %s122
      %p134 = scmp.eq.s32.totalorder %s28, 1
      %p135 = por %p133, %p134
      %p137 = scmp.ne.s32.totalorder %s122, %s136
      %p138 = scmp.eq.s32.totalorder %s28, 0
      %p139 = por %p137, %p138
      %s141 = sadd.s32 %s140, 1
      %p144 = scmp.eq.s32.totalorder %s22, 1
      %p145 = scmp.ne.s32.totalorder %s140, %s142
      %p146 = scmp.eq.s32.totalorder %s22, 0
      %p147 = por %p145, %p146
      %p148 = scmp.ne.s32.totalorder %s140, %s142
      %p149 = scmp.eq.s32.totalorder %s27, 1
      %p150 = por %p148, %p149
      %p151 = scmp.ne.s32.totalorder %s142, %s143
      %p152 = scmp.eq.s32.totalorder %s27, 0
      %p153 = por %p151, %p152
      %p154 = scmp.ne.s32.totalorder %s142, %s143
      %p155 = scmp.eq.s32.totalorder %s28, 1
      %p156 = por %p154, %p155
      %p158 = scmp.ne.s32.totalorder %s143, %s157
      %p159 = scmp.eq.s32.totalorder %s28, 0
      %p160 = por %p158, %p159
      %s162 = sadd.s32 %s161, 1
      %p165 = scmp.eq.s32.totalorder %s22, 1
      %p166 = scmp.ne.s32.totalorder %s161, %s163
      %p167 = scmp.eq.s32.totalorder %s22, 0
      %p168 = por %p166, %p167
      %p169 = scmp.ne.s32.totalorder %s161, %s163
      %p170 = scmp.eq.s32.totalorder %s27, 1
      %p171 = por %p169, %p170
      %p172 = scmp.ne.s32.totalorder %s163, %s164
      %p173 = scmp.eq.s32.totalorder %s27, 0
      %p174 = por %p172, %p173
      %p175 = scmp.ne.s32.totalorder %s163, %s164
      %p176 = scmp.eq.s32.totalorder %s28, 1
      %p177 = por %p175, %p176
      %p179 = scmp.ne.s32.totalorder %s164, %s178
      %p180 = scmp.eq.s32.totalorder %s28, 0
      %p181 = por %p179, %p180
      %s182 = ssub.s32 %s22, %s29
      %p183 = scmp.eq.s32.totalorder %s182, 0
      %s185 = sadd.s32 %s184, 1
      %s186 = scalar_select %p183, %s184, %s185
      %p189 = pneg %p183
      %p190 = scmp.eq.s32.totalorder %s22, 1
      %p191 = por %p189, %p190
      %p192 = scmp.ne.s32.totalorder %s184, %s187
      %p193 = scmp.eq.s32.totalorder %s22, 0
      %p194 = por %p192, %p193
      %p195 = scmp.ne.s32.totalorder %s184, %s187
      %p196 = scmp.eq.s32.totalorder %s27, 1
      %p197 = por %p195, %p196
      %p198 = scmp.ne.s32.totalorder %s187, %s188
      %p199 = scmp.eq.s32.totalorder %s27, 0
      %p200 = por %p198, %p199
      %p201 = scmp.ne.s32.totalorder %s187, %s188
      %p202 = scmp.eq.s32.totalorder %s28, 1
      %p203 = por %p201, %p202
      %p205 = scmp.ne.s32.totalorder %s188, %s204
      %p206 = scmp.eq.s32.totalorder %s28, 0
      %p207 = por %p205, %p206
      %p208 = scmp.le.s32.totalorder 1, %s22
      %p209 = scmp.lt.s32.totalorder %s22, 3
      %p210 = pnand %p208, %p209
      %p211 = pneg %p210
      // Predicated region
      $region9: #{tpu_custom_call.1} parent=5 // pred_check
        _
      $region10: #{tpu_custom_call.1} parent=5 // pred_check_branch
        %213 = sbr.rel (%p210) target = $region12
      $region11: #{tpu_custom_call.1} parent=5 // pred_region
        %s214 = ssub.s32 %s22, 1
        // Predicated region
        $region13: #{tpu_custom_call.1} parent=11 // pred_check
          %p215 = pneg %p69
        $region14: #{tpu_custom_call.1} parent=11 // pred_check_branch
          %217 = sbr.rel (%p215) target = $region16
        $region15: #{tpu_custom_call.1} parent=11 // pred_region
          %219 = vsyncadd [#allocation6], 0
          %s220 = sshll.u32 %s1, 4
          %s221 = int_to_ptr.hbm [resolvable:$true] %s220
          %s222 = sshll.u32 [#allocation5], 4
          %s223 = int_to_ptr.vmem [resolvable:$true] %s222
          %228 = dma.hbm_to_vmem [thread:$0]  %s221, 512, %s223, [#allocation6], 128, 128, 8
        $region16: #{tpu_custom_call.1} parent=11 // pred_fallthru
          _
        // Predicated region
        $region17: #{tpu_custom_call.1} parent=11 // pred_check
          %p229 = pneg %p90
        $region18: #{tpu_custom_call.1} parent=11 // pred_check_branch
          %231 = sbr.rel (%p229) target = $region20
        $region19: #{tpu_custom_call.1} parent=11 // pred_region
          %233 = vsyncadd [#allocation6], 0
          %s235 = sshll.u32 %s2, 4
          %s236 = int_to_ptr.hbm [resolvable:$true] %s235
          %s237 = sshll.u32 [#allocation7], 4
          %s238 = int_to_ptr.vmem [resolvable:$true] %s237
          %240 = dma.hbm_to_vmem [thread:$0]  %s236, 32, %s238, [#allocation6]
        $region20: #{tpu_custom_call.1} parent=11 // pred_fallthru
          _
        // Predicated region
        $region21: #{tpu_custom_call.1} parent=11 // pred_check
          %p241 = pneg %p111
        $region22: #{tpu_custom_call.1} parent=11 // pred_check_branch
          %243 = sbr.rel (%p241) target = $region24
        $region23: #{tpu_custom_call.1} parent=11 // pred_region
          %245 = vsyncadd [#allocation9], 0
          %s247 = sshll.u32 %s3, 4
          %s248 = int_to_ptr.hbm [resolvable:$true] %s247
          %s249 = sshll.u32 [#allocation8], 4
          %s250 = int_to_ptr.vmem [resolvable:$true] %s249
          %252 = dma.hbm_to_vmem [thread:$0]  %s248, 128, %s250, [#allocation9]
        $region24: #{tpu_custom_call.1} parent=11 // pred_fallthru
          _
        // Predicated region
        $region25: #{tpu_custom_call.1} parent=11 // pred_check
          %p253 = pneg %p132
        $region26: #{tpu_custom_call.1} parent=11 // pred_check_branch
          %255 = sbr.rel (%p253) target = $region28
        $region27: #{tpu_custom_call.1} parent=11 // pred_region
          %257 = vsyncadd [#allocation9], 0
          %s259 = sshll.u32 %s4, 4
          %s260 = int_to_ptr.hbm [resolvable:$true] %s259
          %s261 = sshll.u32 [#allocation10], 4
          %s262 = int_to_ptr.vmem [resolvable:$true] %s261
          %264 = dma.hbm_to_vmem [thread:$0]  %s260, 128, %s262, [#allocation9]
        $region28: #{tpu_custom_call.1} parent=11 // pred_fallthru
          _
        // Predicated region
        $region29: #{tpu_custom_call.1} parent=11 // pred_check
          %p265 = pneg %p153
        $region30: #{tpu_custom_call.1} parent=11 // pred_check_branch
          %267 = sbr.rel (%p265) target = $region32
        $region31: #{tpu_custom_call.1} parent=11 // pred_region
          %269 = vsyncadd [#allocation12], 0
          %s270 = sshll.u32 %s5, 4
          %s271 = int_to_ptr.hbm [resolvable:$true] %s270
          %s272 = sshll.u32 [#allocation11], 4
          %s273 = int_to_ptr.vmem [resolvable:$true] %s272
          %278 = dma.hbm_to_vmem [thread:$0]  %s271, 256, %s273, [#allocation12], 64, 64, 4
        $region32: #{tpu_custom_call.1} parent=11 // pred_fallthru
          _
        // Predicated region
        $region33: #{tpu_custom_call.1} parent=11 // pred_check
          %p279 = pneg %p174
        $region34: #{tpu_custom_call.1} parent=11 // pred_check_branch
          %281 = sbr.rel (%p279) target = $region36
        $region35: #{tpu_custom_call.1} parent=11 // pred_region
          _
        $region36: #{tpu_custom_call.1} parent=11 // pred_fallthru
          _
      $region12: #{tpu_custom_call.1} parent=5 // pred_fallthru
        _
      %p282 = scmp.lt.s32.totalorder %s22, 2
      // Predicated region
      $region37: #{tpu_custom_call.1} parent=5 // pred_check
        %p283 = pneg %p282
      $region38: #{tpu_custom_call.1} parent=5 // pred_check_branch
        %285 = sbr.rel (%p283) target = $region40
      $region39: #{tpu_custom_call.1} parent=5 // pred_region
        // Predicated region
        $region41: #{tpu_custom_call.1} parent=39 // pred_check
          %p286 = pneg %p42
        $region42: #{tpu_custom_call.1} parent=39 // pred_check_branch
          %288 = sbr.rel (%p286) target = $region44
        $region43: #{tpu_custom_call.1} parent=39 // pred_region
          %s289 = sand.u32 %s32, 1
          %s290 = scalar_lea.sflag [#allocation3], %s289
          %s291 = sand.u32 %s32, 1
          %s292 = smul.addr %s291, 8
          %s293 = scalar_lea.vmem [#allocation2], %s292
          %295 = vsyncadd %s290, 0
          %s296 = smul.addr %s22, 8
          %s297 = scalar_lea.hbm %s0, %s296
          %s299 = sshll.u32 %s297, 4
          %s300 = int_to_ptr.hbm [resolvable:$true] %s299
          %s301 = sshll.u32 %s293, 4
          %s302 = int_to_ptr.vmem [resolvable:$true] %s301
          %304 = dma.hbm_to_vmem [thread:$0]  %s300, 128, %s302, %s290
        $region44: #{tpu_custom_call.1} parent=39 // pred_fallthru
          _
      $region40: #{tpu_custom_call.1} parent=5 // pred_fallthru
        _
      %p305 = scmp.le.s32.totalorder 1, %s22
      %p306 = scmp.lt.s32.totalorder %s22, 3
      %p307 = pnand %p305, %p306
      %p308 = pneg %p307
      // Predicated region
      $region45: #{tpu_custom_call.1} parent=5 // pred_check
        _
      $region46: #{tpu_custom_call.1} parent=5 // pred_check_branch
        %310 = sbr.rel (%p307) target = $region48
      $region47: #{tpu_custom_call.1} parent=5 // pred_region
        %s311 = ssub.s32 %s22, 1
        %s312 = sand.u32 %s35, 1
        %s313 = scalar_lea.sflag [#allocation3], %s312
        %s314 = sand.u32 %s35, 1
        %s315 = smul.addr %s314, 8
        %s316 = scalar_lea.vmem [#allocation2], %s315
        // Predicated region
        $region49: #{tpu_custom_call.1} parent=47 // pred_check
          %p317 = pneg %p48
        $region50: #{tpu_custom_call.1} parent=47 // pred_check_branch
          %319 = sbr.rel (%p317) target = $region52
        $region51: #{tpu_custom_call.1} parent=47 // pred_region
          %321 = dma.done %s313, 128
        $region52: #{tpu_custom_call.1} parent=47 // pred_fallthru
          _
        // Predicated region
        $region53: #{tpu_custom_call.1} parent=47 // pred_check
          %p322 = pneg %p69
        $region54: #{tpu_custom_call.1} parent=47 // pred_check_branch
          %324 = sbr.rel (%p322) target = $region56
        $region55: #{tpu_custom_call.1} parent=47 // pred_region
          %326 = dma.done [#allocation6], 512
        $region56: #{tpu_custom_call.1} parent=47 // pred_fallthru
          _
        // Predicated region
        $region57: #{tpu_custom_call.1} parent=47 // pred_check
          %p327 = pneg %p90
        $region58: #{tpu_custom_call.1} parent=47 // pred_check_branch
          %329 = sbr.rel (%p327) target = $region60
        $region59: #{tpu_custom_call.1} parent=47 // pred_region
          %331 = dma.done [#allocation6], 32
        $region60: #{tpu_custom_call.1} parent=47 // pred_fallthru
          _
        // Predicated region
        $region61: #{tpu_custom_call.1} parent=47 // pred_check
          %p332 = pneg %p111
        $region62: #{tpu_custom_call.1} parent=47 // pred_check_branch
          %334 = sbr.rel (%p332) target = $region64
        $region63: #{tpu_custom_call.1} parent=47 // pred_region
          %336 = dma.done [#allocation9], 128
        $region64: #{tpu_custom_call.1} parent=47 // pred_fallthru
          _
        // Predicated region
        $region65: #{tpu_custom_call.1} parent=47 // pred_check
          %p337 = pneg %p132
        $region66: #{tpu_custom_call.1} parent=47 // pred_check_branch
          %339 = sbr.rel (%p337) target = $region68
        $region67: #{tpu_custom_call.1} parent=47 // pred_region
          %341 = dma.done [#allocation9], 128
        $region68: #{tpu_custom_call.1} parent=47 // pred_fallthru
          _
        // Predicated region
        $region69: #{tpu_custom_call.1} parent=47 // pred_check
          %p342 = pneg %p153
        $region70: #{tpu_custom_call.1} parent=47 // pred_check_branch
          %344 = sbr.rel (%p342) target = $region72
        $region71: #{tpu_custom_call.1} parent=47 // pred_region
          %346 = dma.done [#allocation12], 256
        $region72: #{tpu_custom_call.1} parent=47 // pred_fallthru
          _
        %s347 = sand.u32 %s35, 1
        %s348 = scalar_lea.sflag [#allocation3], %s347
        %s349 = sand.u32 %s35, 1
        %s350 = smul.addr %s349, 8
        %s351 = scalar_lea.vmem [#allocation2], %s350
        %p352 = pneg %p48
        %p353 = pneg %p45
        %p354 = pneg %p69
        %p355 = pneg %p66
        %p356 = pneg %p90
        %p357 = pneg %p87
        %p358 = pneg %p111
        %p359 = pneg %p108
        %p360 = pneg %p132
        %p361 = pneg %p129
        %p362 = pneg %p153
        %p363 = pneg %p150
        %p364 = pneg %p174
        %p365 = pneg %p171
        %p366 = pneg %p200
        %p367 = pneg %p197
        %s368 = sand.u32 %s187, 1
        %s369 = scalar_lea.sflag [#allocation4], %s368
        %s370 = sand.u32 %s187, 1
        %s371 = smul.addr %s370, 8
        %s372 = scalar_lea.vmem [#allocation13], %s371
        %v374 = vld [vmem:[%s316] sm:$0xff]
        %v375 = vpack.c.bf16 %v374, %v374
        %v376 = vld [vmem:[#allocation5] sm:$0xff]
        %v377 = vld [vmem:[#allocation5 + $0x8] sm:$0xff]
        %v378 = vld [vmem:[#allocation5 + $0x10] sm:$0xff]
        %v379 = vld [vmem:[#allocation5 + $0x18] sm:$0xff]
        %v380 = vld [vmem:[#allocation7] sm:$0x3]
        %v382 = vperm.slane %v380, 0
        %v383 = vperm.slane %v380, 1
        %v390 = vunpack.c.l.b16 %v376
        %v391 = vunpack.c.h.b16 %v376
        %v392 = vunpack.c.l.b16 %v377
        %v393 = vunpack.c.h.b16 %v377
        %v394 = vunpack.c.l.b16 %v378
        %v395 = vunpack.c.h.b16 %v378
        %v396 = vunpack.c.l.b16 %v379
        %v397 = vunpack.c.h.b16 %v379
        %v398 = vpack.c.b16 %v392, %v390
        %v399 = vpack.c.b16 %v393, %v391
        %v400 = vpack.c.b16 %v396, %v394
        %v401 = vpack.c.b16 %v397, %v395
        %vm406 = vcmask 261120
        %v408 = vsel %vm406, %v375, 0
        %410 = vmatpush.bf16.msra.mxu0 0
        %411 = vmatpush.bf16.msra.mxu0 0
        %412 = vmatpush.bf16.msra.mxu0 0
        %413 = vmatpush.bf16.msra.mxu0 0
        %414 = vmatpush.bf16.msra.mxu0 0
        %415 = vmatpush.bf16.msra.mxu0 0
        %416 = vmatpush.bf16.msra.mxu0 %v400
        %417 = vmatpush.bf16.msra.mxu0 %v398
        %418 = vmatmul.bf16.gmra.mxu0 %v408
        %v419 = vpop.f32.mrf.mxu0
        %v420 = vadd.f32 %v382, %v419
        %v421 = vpop.f32.mrf.mxu0
        %422 = vdwg.mxu0
        %423 = vmatpush.bf16.msra.mxu0 0
        %424 = vmatpush.bf16.msra.mxu0 0
        %425 = vmatpush.bf16.msra.mxu0 0
        %426 = vmatpush.bf16.msra.mxu0 0
        %427 = vmatpush.bf16.msra.mxu0 0
        %428 = vmatpush.bf16.msra.mxu0 0
        %429 = vmatpush.bf16.msra.mxu0 %v401
        %430 = vmatpush.bf16.msra.mxu0 %v399
        %431 = vmatmul.bf16.gmra.mxu0 %v408
        %v432 = vpop.f32.mrf.mxu0
        %v433 = vadd.f32 %v383, %v432
        %v434 = vpop.f32.mrf.mxu0
        %435 = vdwg.mxu0
        %v436 = vld [vmem:[#allocation8] sm:$0xff]
        %v437 = vld [vmem:[#allocation10] sm:$0xff]
        %v438 = vmul.f32 %v420, %v436
        %440 = vrot.lane.b32.xlu0 %v437, 96
        %v441 = vpop.permute.xlu0 %440
        %v443 = vmul.f32 %v420, %v441
        %445 = vrot.lane.b32.xlu0 %v443, 32
        %v446 = vpop.permute.xlu0 %445
        %v448 = vadd.f32 %v438, %v446
        %450 = vrot.lane.b32.xlu0 %v436, 32
        %v451 = vpop.permute.xlu0 %450
        %v453 = vmul.f32 %v420, %v451
        %v454 = vmul.f32 %v433, %v437
        %456 = vrot.lane.b32.xlu0 %v454, 32
        %v457 = vpop.permute.xlu0 %456
        %v459 = vadd.f32 %v453, %v457
        %v460 = vpack.c.bf16 %v448, %v448
        %v461 = vpack.c.bf16 %v459, %v459
        %v462 = vpack.c.bf16 %v420, %v420
        %v464 = vunpack.c.l.b16 %v461
        %v465 = vpack.c.b16 %v464, %v464
        %466 = vrot.lane.b32.xlu0 %v465, 96
        %v467 = vpop.permute.xlu0 %466
        %vm468 = vcmask 64512
        %v470 = vsel %vm468, %v460, 0
        %v473 = vsel %vm468, %v467, 0
        %475 = vmatpush.bf16.xpose.msra.mxu0 0
        %476 = vmatpush.bf16.xpose.msra.mxu0 0
        %477 = vmatpush.bf16.xpose.msra.mxu0 0
        %478 = vmatpush.bf16.xpose.msra.mxu0 0
        %479 = vmatpush.bf16.xpose.msra.mxu0 0
        %480 = vmatpush.bf16.xpose.msra.mxu0 0
        %481 = vmatpush.bf16.xpose.msra.mxu0 0
        %482 = vmatpush.bf16.xpose.msra.mxu0 %v473
        %483 = vmatmul.bf16.gmra.mxu0 %v470
        %v484 = vpop.f32.mrf.mxu0
        %v485 = vadd.f32 0.0, %v484
        %v486 = vpop.f32.mrf.mxu0
        %487 = vdwg.mxu0
        %v488 = vmul.f32 %v485, 0.35355338
        %v489 = vsel %vm468, %v488, -inf
        %490 = vmax.xlane.f32.xlu0 %v489
        %v491 = vpop.xlane.xlu0 %490
        %v492 = vsub.f32 %v488, %v491
        %v493 = vmul.f32 %v492, 1.442695
        %v494 = vpow.pop %v493
        %v495 = vsel %vm468, %v494, 0.0
        %496 = vadd.xlane.f32.xlu0 %v495
        %v497 = vpop.xlane.xlu0 %496
        %v498 = vrcp.pop %v497
        %v499 = vmul.f32 %v494, %v498
        %v500 = vpack.c.bf16 %v499, %v499
        %v502 = vunpack.c.l.b16 %v462
        %v503 = vpack.c.b16 %v502, %v502
        %504 = vrot.lane.b32.xlu0 %v503, 64
        %v505 = vpop.permute.xlu0 %504
        %v507 = vsel %vm468, %v500, 0
        %vm509 = vcmask 1043456
        %v511 = vsel %vm509, %v505, 0
        %513 = vmatpush.bf16.msra.mxu0 0
        %514 = vmatpush.bf16.msra.mxu0 0
        %515 = vmatpush.bf16.msra.mxu0 0
        %516 = vmatpush.bf16.msra.mxu0 0
        %517 = vmatpush.bf16.msra.mxu0 0
        %518 = vmatpush.bf16.msra.mxu0 0
        %519 = vmatpush.bf16.msra.mxu0 0
        %520 = vmatpush.bf16.msra.mxu0 %v511
        %521 = vmatmul.bf16.gmra.mxu0 %v507
        %v522 = vpop.f32.mrf.mxu0
        %v523 = vadd.f32 0.0, %v522
        %v524 = vpop.f32.mrf.mxu0
        %525 = vdwg.mxu0
        %v526 = vpack.c.bf16 %v523, %v523
        %v527 = vld [vmem:[#allocation11] sm:$0xf]
        %v529 = vunpack.c.l.b16 %v460
        %v530 = vpack.c.b16 %v529, %v529
        %531 = vrot.lane.b32.xlu0 %v530, 120
        %v532 = vpop.permute.xlu0 %531
        %533 = vrot.lane.b32.xlu0 %v465, 88
        %v534 = vpop.permute.xlu0 %533
        %v536 = vsel %vm468, %v532, 0
        %v539 = vsel %vm468, %v534, 0
        %541 = vmatpush.bf16.xpose.msra.mxu0 0
        %542 = vmatpush.bf16.xpose.msra.mxu0 0
        %543 = vmatpush.bf16.xpose.msra.mxu0 0
        %544 = vmatpush.bf16.xpose.msra.mxu0 0
        %545 = vmatpush.bf16.xpose.msra.mxu0 0
        %546 = vmatpush.bf16.xpose.msra.mxu0 0
        %547 = vmatpush.bf16.xpose.msra.mxu0 0
        %548 = vmatpush.bf16.xpose.msra.mxu0 %v539
        %549 = vmatmul.bf16.gmra.mxu0 %v536
        %v550 = vpop.f32.mrf.mxu0
        %v551 = vadd.f32 0.0, %v550
        %v552 = vpop.f32.mrf.mxu0
        %553 = vdwg.mxu0
        %v554 = vmul.f32 %v551, 0.35355338
        %v555 = vsel %vm468, %v554, -inf
        %556 = vmax.xlane.f32.xlu0 %v555
        %v557 = vpop.xlane.xlu0 %556
        %v558 = vsub.f32 %v554, %v557
        %v559 = vmul.f32 %v558, 1.442695
        %v560 = vpow.pop %v559
        %v561 = vsel %vm468, %v560, 0.0
        %562 = vadd.xlane.f32.xlu0 %v561
        %v563 = vpop.xlane.xlu0 %562
        %v564 = vrcp.pop %v563
        %v565 = vmul.f32 %v560, %v564
        %v566 = vpack.c.bf16 %v565, %v565
        %567 = vrot.lane.b32.xlu0 %v503, 56
        %v568 = vpop.permute.xlu0 %567
        %v570 = vsel %vm468, %v566, 0
        %v573 = vsel %vm509, %v568, 0
        %575 = vmatpush.bf16.msra.mxu0 0
        %576 = vmatpush.bf16.msra.mxu0 0
        %577 = vmatpush.bf16.msra.mxu0 0
        %578 = vmatpush.bf16.msra.mxu0 0
        %579 = vmatpush.bf16.msra.mxu0 0
        %580 = vmatpush.bf16.msra.mxu0 0
        %581 = vmatpush.bf16.msra.mxu0 0
        %582 = vmatpush.bf16.msra.mxu0 %v573
        %583 = vmatmul.bf16.gmra.mxu0 %v570
        %v584 = vpop.f32.mrf.mxu0
        %v585 = vadd.f32 0.0, %v584
        %v586 = vpop.f32.mrf.mxu0
        %587 = vdwg.mxu0
        %v588 = vpack.c.bf16 %v585, %v585
        %s589 = scalar_lea.vmem [#allocation11], 4
        %v590 = vld [vmem:[%s589] sm:$0xf]
        %v592 = vsel %vm468, %v588, 0
        %v595 = vsel %vm509, %v590, 0
        %597 = vmatpush.bf16.msra.mxu0 0
        %598 = vmatpush.bf16.msra.mxu0 0
        %599 = vmatpush.bf16.msra.mxu0 0
        %600 = vmatpush.bf16.msra.mxu0 0
        %601 = vmatpush.bf16.msra.mxu0 0
        %602 = vmatpush.bf16.msra.mxu0 0
        %603 = vmatpush.bf16.msra.mxu0 0
        %604 = vmatpush.bf16.msra.mxu0 %v595
        %605 = vmatmul.bf16.gmra.mxu0 %v592
        %v606 = vpop.f32.mrf.mxu0
        %v607 = vadd.f32 0.0, %v606
        %v608 = vpop.f32.mrf.mxu0
        %609 = vdwg.mxu0
        %v611 = vsel %vm468, %v526, 0
        %v614 = vsel %vm509, %v527, 0
        %616 = vmatpush.bf16.msra.mxu0 0
        %617 = vmatpush.bf16.msra.mxu0 0
        %618 = vmatpush.bf16.msra.mxu0 0
        %619 = vmatpush.bf16.msra.mxu0 0
        %620 = vmatpush.bf16.msra.mxu0 0
        %621 = vmatpush.bf16.msra.mxu0 0
        %622 = vmatpush.bf16.msra.mxu0 0
        %623 = vmatpush.bf16.msra.mxu0 %v614
        %624 = vmatmul.bf16.gmra.mxu0 %v611
        %v625 = vpop.f32.mrf.mxu0
        %v626 = vadd.f32 %v607, %v625
        %v627 = vpop.f32.mrf.mxu0
        %628 = vdwg.mxu0
        %629 = vrot.lane.b32.xlu0 %v530, 112
        %v630 = vpop.permute.xlu0 %629
        %631 = vrot.lane.b32.xlu0 %v465, 80
        %v632 = vpop.permute.xlu0 %631
        %v634 = vsel %vm468, %v630, 0
        %v637 = vsel %vm468, %v632, 0
        %639 = vmatpush.bf16.xpose.msra.mxu0 0
        %640 = vmatpush.bf16.xpose.msra.mxu0 0
        %641 = vmatpush.bf16.xpose.msra.mxu0 0
        %642 = vmatpush.bf16.xpose.msra.mxu0 0
        %643 = vmatpush.bf16.xpose.msra.mxu0 0
        %644 = vmatpush.bf16.xpose.msra.mxu0 0
        %645 = vmatpush.bf16.xpose.msra.mxu0 0
        %646 = vmatpush.bf16.xpose.msra.mxu0 %v637
        %647 = vmatmul.bf16.gmra.mxu0 %v634
        %v648 = vpop.f32.mrf.mxu0
        %v649 = vadd.f32 0.0, %v648
        %v650 = vpop.f32.mrf.mxu0
        %651 = vdwg.mxu0
        %v652 = vmul.f32 %v649, 0.35355338
        %v653 = vsel %vm468, %v652, -inf
        %654 = vmax.xlane.f32.xlu0 %v653
        %v655 = vpop.xlane.xlu0 %654
        %v656 = vsub.f32 %v652, %v655
        %v657 = vmul.f32 %v656, 1.442695
        %v658 = vpow.pop %v657
        %v659 = vsel %vm468, %v658, 0.0
        %660 = vadd.xlane.f32.xlu0 %v659
        %v661 = vpop.xlane.xlu0 %660
        %v662 = vrcp.pop %v661
        %v663 = vmul.f32 %v658, %v662
        %v664 = vpack.c.bf16 %v663, %v663
        %665 = vrot.lane.b32.xlu0 %v503, 48
        %v666 = vpop.permute.xlu0 %665
        %v668 = vsel %vm468, %v664, 0
        %v671 = vsel %vm509, %v666, 0
        %673 = vmatpush.bf16.msra.mxu0 0
        %674 = vmatpush.bf16.msra.mxu0 0
        %675 = vmatpush.bf16.msra.mxu0 0
        %676 = vmatpush.bf16.msra.mxu0 0
        %677 = vmatpush.bf16.msra.mxu0 0
        %678 = vmatpush.bf16.msra.mxu0 0
        %679 = vmatpush.bf16.msra.mxu0 0
        %680 = vmatpush.bf16.msra.mxu0 %v671
        %681 = vmatmul.bf16.gmra.mxu0 %v668
        %v682 = vpop.f32.mrf.mxu0
        %v683 = vadd.f32 0.0, %v682
        %v684 = vpop.f32.mrf.mxu0
        %685 = vdwg.mxu0
        %v686 = vpack.c.bf16 %v683, %v683
        %s687 = scalar_lea.vmem [#allocation11], 8
        %v688 = vld [vmem:[%s687] sm:$0xf]
        %v690 = vsel %vm468, %v686, 0
        %v693 = vsel %vm509, %v688, 0
        %695 = vmatpush.bf16.msra.mxu0 0
        %696 = vmatpush.bf16.msra.mxu0 0
        %697 = vmatpush.bf16.msra.mxu0 0
        %698 = vmatpush.bf16.msra.mxu0 0
        %699 = vmatpush.bf16.msra.mxu0 0
        %700 = vmatpush.bf16.msra.mxu0 0
        %701 = vmatpush.bf16.msra.mxu0 0
        %702 = vmatpush.bf16.msra.mxu0 %v693
        %703 = vmatmul.bf16.gmra.mxu0 %v690
        %v704 = vpop.f32.mrf.mxu0
        %v705 = vadd.f32 0.0, %v704
        %v706 = vpop.f32.mrf.mxu0
        %707 = vdwg.mxu0
        %v708 = vadd.f32 %v626, %v705
        %709 = vrot.lane.b32.xlu0 %v530, 104
        %v710 = vpop.permute.xlu0 %709
        %711 = vrot.lane.b32.xlu0 %v465, 72
        %v712 = vpop.permute.xlu0 %711
        %v714 = vsel %vm468, %v710, 0
        %v717 = vsel %vm468, %v712, 0
        %719 = vmatpush.bf16.xpose.msra.mxu0 0
        %720 = vmatpush.bf16.xpose.msra.mxu0 0
        %721 = vmatpush.bf16.xpose.msra.mxu0 0
        %722 = vmatpush.bf16.xpose.msra.mxu0 0
        %723 = vmatpush.bf16.xpose.msra.mxu0 0
        %724 = vmatpush.bf16.xpose.msra.mxu0 0
        %725 = vmatpush.bf16.xpose.msra.mxu0 0
        %726 = vmatpush.bf16.xpose.msra.mxu0 %v717
        %727 = vmatmul.bf16.gmra.mxu0 %v714
        %v728 = vpop.f32.mrf.mxu0
        %v729 = vadd.f32 0.0, %v728
        %v730 = vpop.f32.mrf.mxu0
        %731 = vdwg.mxu0
        %v732 = vmul.f32 %v729, 0.35355338
        %v733 = vsel %vm468, %v732, -inf
        %734 = vmax.xlane.f32.xlu0 %v733
        %v735 = vpop.xlane.xlu0 %734
        %v736 = vsub.f32 %v732, %v735
        %v737 = vmul.f32 %v736, 1.442695
        %v738 = vpow.pop %v737
        %v739 = vsel %vm468, %v738, 0.0
        %740 = vadd.xlane.f32.xlu0 %v739
        %v741 = vpop.xlane.xlu0 %740
        %v742 = vrcp.pop %v741
        %v743 = vmul.f32 %v738, %v742
        %v744 = vpack.c.bf16 %v743, %v743
        %745 = vrot.lane.b32.xlu0 %v503, 40
        %v746 = vpop.permute.xlu0 %745
        %v748 = vsel %vm468, %v744, 0
        %v751 = vsel %vm509, %v746, 0
        %753 = vmatpush.bf16.msra.mxu0 0
        %754 = vmatpush.bf16.msra.mxu0 0
        %755 = vmatpush.bf16.msra.mxu0 0
        %756 = vmatpush.bf16.msra.mxu0 0
        %757 = vmatpush.bf16.msra.mxu0 0
        %758 = vmatpush.bf16.msra.mxu0 0
        %759 = vmatpush.bf16.msra.mxu0 0
        %760 = vmatpush.bf16.msra.mxu0 %v751
        %761 = vmatmul.bf16.gmra.mxu0 %v748
        %v762 = vpop.f32.mrf.mxu0
        %v763 = vadd.f32 0.0, %v762
        %v764 = vpop.f32.mrf.mxu0
        %765 = vdwg.mxu0
        %v766 = vpack.c.bf16 %v763, %v763
        %s767 = scalar_lea.vmem [#allocation11], 12
        %v768 = vld [vmem:[%s767] sm:$0xf]
        %v770 = vsel %vm468, %v766, 0
        %v773 = vsel %vm509, %v768, 0
        %775 = vmatpush.bf16.msra.mxu0 0
        %776 = vmatpush.bf16.msra.mxu0 0
        %777 = vmatpush.bf16.msra.mxu0 0
        %778 = vmatpush.bf16.msra.mxu0 0
        %779 = vmatpush.bf16.msra.mxu0 0
        %780 = vmatpush.bf16.msra.mxu0 0
        %781 = vmatpush.bf16.msra.mxu0 0
        %782 = vmatpush.bf16.msra.mxu0 %v773
        %783 = vmatmul.bf16.gmra.mxu0 %v770
        %v784 = vpop.f32.mrf.mxu0
        %v785 = vadd.f32 0.0, %v784
        %v786 = vpop.f32.mrf.mxu0
        %787 = vdwg.mxu0
        %v788 = vadd.f32 %v708, %v785
        %v789 = vld [vmem:[%s6] sm:$0x1]
        %v791 = vperm.slane %v789, 0
        %v793 = vadd.f32 %v788, %v791
        %794 = vst.msk [vmem:[%s372] sm:$0xff] %vm406, %v793
        %s795 = sand.u32 %s187, 1
        %s796 = scalar_lea.sflag [#allocation4], %s795
        %s797 = sand.u32 %s187, 1
        %s798 = smul.addr %s797, 8
        %s799 = scalar_lea.vmem [#allocation13], %s798
        // Predicated region
        $region73: #{tpu_custom_call.1} parent=47 // pred_check
          %p800 = pneg %p197
        $region74: #{tpu_custom_call.1} parent=47 // pred_check_branch
          %802 = sbr.rel (%p800) target = $region76
        $region75: #{tpu_custom_call.1} parent=47 // pred_region
          %804 = vsyncadd %s796, 0
          %s805 = smul.addr %s27, 8
          %s806 = scalar_lea.hbm %s7, %s805
          %s808 = sshll.u32 %s799, 4
          %s809 = int_to_ptr.vmem [resolvable:$true] %s808
          %s810 = sshll.u32 %s806, 4
          %s811 = int_to_ptr.hbm [resolvable:$true] %s810
          %813 = dma.vmem_to_hbm [thread:$0]  %s809, 128, %s811, %s796
        $region76: #{tpu_custom_call.1} parent=47 // pred_fallthru
          _
      $region48: #{tpu_custom_call.1} parent=5 // pred_fallthru
        _
      %p814 = scmp.le.s32.totalorder 2, %s22
      // Predicated region
      $region77: #{tpu_custom_call.1} parent=5 // pred_check
        %p815 = pneg %p814
      $region78: #{tpu_custom_call.1} parent=5 // pred_check_branch
        %817 = sbr.rel (%p815) target = $region80
      $region79: #{tpu_custom_call.1} parent=5 // pred_region
        %s818 = ssub.s32 %s22, 2
        // Predicated region
        $region81: #{tpu_custom_call.1} parent=79 // pred_check
          %p819 = pneg %p203
        $region82: #{tpu_custom_call.1} parent=79 // pred_check_branch
          %821 = sbr.rel (%p819) target = $region84
        $region83: #{tpu_custom_call.1} parent=79 // pred_region
          %s822 = sand.u32 %s188, 1
          %s823 = scalar_lea.sflag [#allocation4], %s822
          %s824 = sand.u32 %s188, 1
          %s825 = smul.addr %s824, 8
          %s826 = scalar_lea.vmem [#allocation13], %s825
          %828 = dma.done %s823, 128
        $region84: #{tpu_custom_call.1} parent=79 // pred_fallthru
          _
      $region80: #{tpu_custom_call.1} parent=5 // pred_fallthru
        _
    $region6: #{tpu_custom_call.1} parent=1 // loop_footer
      %s26 = sadd.s32 1, %s22
    $region7: #{tpu_custom_call.1} parent=1 // loop_footer_branch
      %21 = sbr.rel target = $region3
    $region8: #{tpu_custom_call.1} parent=1 // loop_exit
      _
    %829 = vsyncpa [#allocation3], 1
    %s830 = scalar_lea.sflag [#allocation3], 1
    %831 = vsyncpa %s830, 1
    %832 = vsyncpa [#allocation6], 1
    %833 = vsyncpa [#allocation9], 1
    %834 = vsyncpa [#allocation12], 1
    %835 = vsyncpa [#allocation4], 1
    %s836 = scalar_lea.sflag [#allocation4], 1
    %837 = vsyncpa %s836, 1

// kernel: tpu_custom_call.1
$region0: #{tpu_custom_call.1}
  #allocation0 [shape = 'u32[]', space=smem, size = 0x4, offset = 0x4, fixed_abs, tag = 'smem constant byte address 0x4 - core index']
  #allocation1 [shape = 'u32[72,128]{1,0:T(1,128)}', space=vmem, size = 0x9000, scoped, tag = 'internal scratch']
  %s0 = inlined_call_operand.hbm [shape: f32[2,8,32], index: 0, kind: input, shape index: {}]
  %s1 = inlined_call_operand.hbm [shape: bf16[32,160], index: 1, kind: input, shape index: {}]
  %s2 = inlined_call_operand.hbm [shape: f32[1,160], index: 2, kind: input, shape index: {}]
  %s3 = inlined_call_operand.hbm [shape: f32[8,32], index: 3, kind: input, shape index: {}]
  %s4 = inlined_call_operand.hbm [shape: f32[8,32], index: 4, kind: input, shape index: {}]
  %s5 = inlined_call_operand.hbm [shape: bf16[4,8,32], index: 5, kind: input, shape index: {}]
  %s6 = inlined_call_operand.vmem [shape: f32[1,32], index: 6, kind: input, shape index: {}]
  %s7 = inlined_call_operand.hbm [shape: f32[2,8,32], index: 7, kind: output, shape index: {}]
  %s8 = sld [smem:[#allocation0]]
  $region85: #{tpu_custom_call.1} parent=0
    _
  %s10 = ssub.s32 1, %s8
  %s11 = scalar_select 0, %s10, %s8
  $region1: #{tpu_custom_call.1} parent=0
    #allocation2 [shape = 'u8[8192]{0}', space=vmem, size = 0x2000, scoped, tag = 'input window, operand 0']
    #allocation3 [shape = 's32[2]{0}', space=sflag, size = 0x8, scoped, tag = 'scoped memory for tpu_custom_call.1']
    #allocation4 [shape = 's32[2]{0}', space=sflag, size = 0x8, scoped, tag = 'scoped memory for tpu_custom_call.1']
    #allocation5 [shape = 'u8[16384]{0}', space=vmem, size = 0x4000, scoped, tag = 'input window, operand 1, single buffered']
    #allocation6 [shape = 's32[1]{0}', space=sflag, size = 0x4, scoped, tag = 'scoped memory for tpu_custom_call.1']
    #allocation7 [shape = 'u8[1024]{0}', space=vmem, size = 0x400, scoped, tag = 'input window, operand 2, single buffered']
    #allocation8 [shape = 'u8[4096]{0}', space=vmem, size = 0x1000, scoped, tag = 'input window, operand 3, single buffered']
    #allocation9 [shape = 's32[1]{0}', space=sflag, size = 0x4, scoped, tag = 'scoped memory for tpu_custom_call.1']
    #allocation10 [shape = 'u8[4096]{0}', space=vmem, size = 0x1000, scoped, tag = 'input window, operand 4, single buffered']
    #allocation11 [shape = 'u8[8192]{0}', space=vmem, size = 0x2000, scoped, tag = 'input window, operand 5, single buffered']
    #allocation12 [shape = 's32[1]{0}', space=sflag, size = 0x4, scoped, tag = 'scoped memory for tpu_custom_call.1']
    #allocation13 [shape = 'u8[8192]{0}', space=vmem, size = 0x2000, scoped, tag = 'output window, operand 0']
    %12 = vsyncpa [#allocation3], 0
    %s13 = scalar_lea.sflag [#allocation3], 1
    %14 = vsyncpa %s13, 0
    %15 = vsyncpa [#allocation6], 0
    %16 = vsyncpa [#allocation9], 0
    %17 = vsyncpa [#allocation12], 0
    %18 = vsyncpa [#allocation4], 0
    %s19 = scalar_lea.sflag [#allocation4], 1
    %20 = vsyncpa %s19, 0
    loop: start=0, step=1, limit=4
    $region2: #{tpu_custom_call.1} parent=1 // loop_pre_header
      _
    $region3: #{tpu_custom_call.1} parent=1 // loop_header
      %s22 = sphi 0, %s26
      %p23 = scmp.ge.s32.totalorder %s22, 4
      %s32 = sphi 0, %s34
      %s35 = sphi 0, %s32
      %s36 = sphi 0, %s35
      %s52 = sphi 0, %s36
      %s56 = sphi 0, %s56
      %s58 = sphi 0, %s56
      %s59 = sphi 0, %s58
      %s73 = sphi 0, %s59
      %s77 = sphi 0, %s77
      %s79 = sphi 0, %s77
      %s80 = sphi 0, %s79
      %s94 = sphi 0, %s80
      %s98 = sphi 0, %s98
      %s100 = sphi 0, %s98
      %s101 = sphi 0, %s100
      %s115 = sphi 0, %s101
      %s119 = sphi 0, %s119
      %s121 = sphi 0, %s119
      %s122 = sphi 0, %s121
      %s136 = sphi 0, %s122
      %s140 = sphi 0, %s140
      %s142 = sphi 0, %s140
      %s143 = sphi 0, %s142
      %s157 = sphi 0, %s143
      %s161 = sphi 0, %s161
      %s163 = sphi 0, %s161
      %s164 = sphi 0, %s163
      %s178 = sphi 0, %s164
      %s184 = sphi 0, %s186
      %s187 = sphi 0, %s184
      %s188 = sphi 0, %s187
      %s204 = sphi 0, %s188
    $region4: #{tpu_custom_call.1} parent=1 // loop_header_branch
      %25 = sbr.rel (%p23) target = $region8
    $region5: #{tpu_custom_call.1} parent=1 // loop_body
      %s27 = ssub.s32 %s22, 1
      %s28 = ssub.s32 %s22, 2
      %s29 = sadd.s32 %s22, 1
      %s30 = ssub.s32 %s22, %s29
      %p31 = scmp.eq.s32.totalorder %s30, 0
      %s33 = sadd.s32 %s32, 1
      %s34 = scalar_select %p31, %s32, %s33
      %p37 = pneg %p31
      %p38 = scmp.eq.s32.totalorder %s22, 1
      %p39 = por %p37, %p38
      %p40 = scmp.ne.s32.totalorder %s32, %s35
      %p41 = scmp.eq.s32.totalorder %s22, 0
      %p42 = por %p40, %p41
      %p43 = scmp.ne.s32.totalorder %s32, %s35
      %p44 = scmp.eq.s32.totalorder %s27, 1
      %p45 = por %p43, %p44
      %p46 = scmp.ne.s32.totalorder %s35, %s36
      %p47 = scmp.eq.s32.totalorder %s27, 0
      %p48 = por %p46, %p47
      %p49 = scmp.ne.s32.totalorder %s35, %s36
      %p50 = scmp.eq.s32.totalorder %s28, 1
      %p51 = por %p49, %p50
      %p53 = scmp.ne.s32.totalorder %s36, %s52
      %p54 = scmp.eq.s32.totalorder %s28, 0
      %p55 = por %p53, %p54
      %s57 = sadd.s32 %s56, 1
      %p60 = scmp.eq.s32.totalorder %s22, 1
      %p61 = scmp.ne.s32.totalorder %s56, %s58
      %p62 = scmp.eq.s32.totalorder %s22, 0
      %p63 = por %p61, %p62
      %p64 = scmp.ne.s32.totalorder %s56, %s58
      %p65 = scmp.eq.s32.totalorder %s27, 1
      %p66 = por %p64, %p65
      %p67 = scmp.ne.s32.totalorder %s58, %s59
      %p68 = scmp.eq.s32.totalorder %s27, 0
      %p69 = por %p67, %p68
      %p70 = scmp.ne.s32.totalorder %s58, %s59
      %p71 = scmp.eq.s32.totalorder %s28, 1
      %p72 = por %p70, %p71
      %p74 = scmp.ne.s32.totalorder %s59, %s73
      %p75 = scmp.eq.s32.totalorder %s28, 0
      %p76 = por %p74, %p75
      %s78 = sadd.s32 %s77, 1
      %p81 = scmp.eq.s32.totalorder %s22, 1
      %p82 = scmp.ne.s32.totalorder %s77, %s79
      %p83 = scmp.eq.s32.totalorder %s22, 0
      %p84 = por %p82, %p83
      %p85 = scmp.ne.s32.totalorder %s77, %s79
      %p86 = scmp.eq.s32.totalorder %s27, 1
      %p87 = por %p85, %p86
      %p88 = scmp.ne.s32.totalorder %s79, %s80
      %p89 = scmp.eq.s32.totalorder %s27, 0
      %p90 = por %p88, %p89
      %p91 = scmp.ne.s32.totalorder %s79, %s80
      %p92 = scmp.eq.s32.totalorder %s28, 1
      %p93 = por %p91, %p92
      %p95 = scmp.ne.s32.totalorder %s80, %s94
      %p96 = scmp.eq.s32.totalorder %s28, 0
      %p97 = por %p95, %p96
      %s99 = sadd.s32 %s98, 1
      %p102 = scmp.eq.s32.totalorder %s22, 1
      %p103 = scmp.ne.s32.totalorder %s98, %s100
      %p104 = scmp.eq.s32.totalorder %s22, 0
      %p105 = por %p103, %p104
      %p106 = scmp.ne.s32.totalorder %s98, %s100
      %p107 = scmp.eq.s32.totalorder %s27, 1
      %p108 = por %p106, %p107
      %p109 = scmp.ne.s32.totalorder %s100, %s101
      %p110 = scmp.eq.s32.totalorder %s27, 0
      %p111 = por %p109, %p110
      %p112 = scmp.ne.s32.totalorder %s100, %s101
      %p113 = scmp.eq.s32.totalorder %s28, 1
      %p114 = por %p112, %p113
      %p116 = scmp.ne.s32.totalorder %s101, %s115
      %p117 = scmp.eq.s32.totalorder %s28, 0
      %p118 = por %p116, %p117
      %s120 = sadd.s32 %s119, 1
      %p123 = scmp.eq.s32.totalorder %s22, 1
      %p124 = scmp.ne.s32.totalorder %s119, %s121
      %p125 = scmp.eq.s32.totalorder %s22, 0
      %p126 = por %p124, %p125
      %p127 = scmp.ne.s32.totalorder %s119, %s121
      %p128 = scmp.eq.s32.totalorder %s27, 1
      %p129 = por %p127, %p128
      %p130 = scmp.ne.s32.totalorder %s121, %s122
      %p131 = scmp.eq.s32.totalorder %s27, 0
      %p132 = por %p130, %p131
      %p133 = scmp.ne.s32.totalorder %s121, %s122
      %p134 = scmp.eq.s32.totalorder %s28, 1
      %p135 = por %p133, %p134
      %p137 = scmp.ne.s32.totalorder %s122, %s136
      %p138 = scmp.eq.s32.totalorder %s28, 0
      %p139 = por %p137, %p138
      %s141 = sadd.s32 %s140, 1
      %p144 = scmp.eq.s32.totalorder %s22, 1
      %p145 = scmp.ne.s32.totalorder %s140, %s142
      %p146 = scmp.eq.s32.totalorder %s22, 0
      %p147 = por %p145, %p146
      %p148 = scmp.ne.s32.totalorder %s140, %s142
      %p149 = scmp.eq.s32.totalorder %s27, 1
      %p150 = por %p148, %p149
      %p151 = scmp.ne.s32.totalorder %s142, %s143
      %p152 = scmp.eq.s32.totalorder %s27, 0
      %p153 = por %p151, %p152
      %p154 = scmp.ne.s32.totalorder %s142, %s143
      %p155 = scmp.eq.s32.totalorder %s28, 1
      %p156 = por %p154, %p155
      %p158 = scmp.ne.s32.totalorder %s143, %s157
      %p159 = scmp.eq.s32.totalorder %s28, 0
      %p160 = por %p158, %p159
      %s162 = sadd.s32 %s161, 1
      %p165 = scmp.eq.s32.totalorder %s22, 1
      %p166 = scmp.ne.s32.totalorder %s161, %s163
      %p167 = scmp.eq.s32.totalorder %s22, 0
      %p168 = por %p166, %p167
      %p169 = scmp.ne.s32.totalorder %s161, %s163
      %p170 = scmp.eq.s32.totalorder %s27, 1
      %p171 = por %p169, %p170
      %p172 = scmp.ne.s32.totalorder %s163, %s164
      %p173 = scmp.eq.s32.totalorder %s27, 0
      %p174 = por %p172, %p173
      %p175 = scmp.ne.s32.totalorder %s163, %s164
      %p176 = scmp.eq.s32.totalorder %s28, 1
      %p177 = por %p175, %p176
      %p179 = scmp.ne.s32.totalorder %s164, %s178
      %p180 = scmp.eq.s32.totalorder %s28, 0
      %p181 = por %p179, %p180
      %s182 = ssub.s32 %s22, %s29
      %p183 = scmp.eq.s32.totalorder %s182, 0
      %s185 = sadd.s32 %s184, 1
      %s186 = scalar_select %p183, %s184, %s185
      %p189 = pneg %p183
      %p190 = scmp.eq.s32.totalorder %s22, 1
      %p191 = por %p189, %p190
      %p192 = scmp.ne.s32.totalorder %s184, %s187
      %p193 = scmp.eq.s32.totalorder %s22, 0
      %p194 = por %p192, %p193
      %p195 = scmp.ne.s32.totalorder %s184, %s187
      %p196 = scmp.eq.s32.totalorder %s27, 1
      %p197 = por %p195, %p196
      %p198 = scmp.ne.s32.totalorder %s187, %s188
      %p199 = scmp.eq.s32.totalorder %s27, 0
      %p200 = por %p198, %p199
      %p201 = scmp.ne.s32.totalorder %s187, %s188
      %p202 = scmp.eq.s32.totalorder %s28, 1
      %p203 = por %p201, %p202
      %p205 = scmp.ne.s32.totalorder %s188, %s204
      %p206 = scmp.eq.s32.totalorder %s28, 0
      %p207 = por %p205, %p206
      %p208 = scmp.le.s32.totalorder 1, %s22
      %p209 = scmp.lt.s32.totalorder %s22, 3
      %p210 = pnand %p208, %p209
      %p211 = pneg %p210
      // Predicated region
      $region9: #{tpu_custom_call.1} parent=5 // pred_check
        _
      $region10: #{tpu_custom_call.1} parent=5 // pred_check_branch
        %213 = sbr.rel (%p210) target = $region12
      $region11: #{tpu_custom_call.1} parent=5 // pred_region
        %s214 = ssub.s32 %s22, 1
        // Predicated region
        $region13: #{tpu_custom_call.1} parent=11 // pred_check
          %p215 = pneg %p69
        $region14: #{tpu_custom_call.1} parent=11 // pred_check_branch
          %217 = sbr.rel (%p215) target = $region16
        $region15: #{tpu_custom_call.1} parent=11 // pred_region
          %219 = vsyncadd [#allocation6], 0
          %s220 = sshll.u32 %s1, 4
          %s221 = int_to_ptr.hbm [resolvable:$true] %s220
          %s222 = sshll.u32 [#allocation5], 4
          %s223 = int_to_ptr.vmem [resolvable:$true] %s222
          %228 = dma.hbm_to_vmem [thread:$0]  %s221, 512, %s223, [#allocation6], 128, 128, 8
        $region16: #{tpu_custom_call.1} parent=11 // pred_fallthru
          _
        // Predicated region
        $region17: #{tpu_custom_call.1} parent=11 // pred_check
          %p229 = pneg %p90
        $region18: #{tpu_custom_call.1} parent=11 // pred_check_branch
          %231 = sbr.rel (%p229) target = $region20
        $region19: #{tpu_custom_call.1} parent=11 // pred_region
          %233 = vsyncadd [#allocation6], 0
          %s235 = sshll.u32 %s2, 4
          %s236 = int_to_ptr.hbm [resolvable:$true] %s235
          %s237 = sshll.u32 [#allocation7], 4
          %s238 = int_to_ptr.vmem [resolvable:$true] %s237
          %240 = dma.hbm_to_vmem [thread:$0]  %s236, 32, %s238, [#allocation6]
        $region20: #{tpu_custom_call.1} parent=11 // pred_fallthru
          _
        // Predicated region
        $region21: #{tpu_custom_call.1} parent=11 // pred_check
          %p241 = pneg %p111
        $region22: #{tpu_custom_call.1} parent=11 // pred_check_branch
          %243 = sbr.rel (%p241) target = $region24
        $region23: #{tpu_custom_call.1} parent=11 // pred_region
          %245 = vsyncadd [#allocation9], 0
          %s247 = sshll.u32 %s3, 4
          %s248 = int_to_ptr.hbm [resolvable:$true] %s247
          %s249 = sshll.u32 [#allocation8], 4
          %s250 = int_to_ptr.vmem [resolvable:$true] %s249
          %252 = dma.hbm_to_vmem [thread:$0]  %s248, 128, %s250, [#allocation9]
        $region24: #{tpu_custom_call.1} parent=11 // pred_fallthru
          _
        // Predicated region
        $region25: #{tpu_custom_call.1} parent=11 // pred_check
          %p253 = pneg %p132
        $region26: #{tpu_custom_call.1} parent=11 // pred_check_branch
          %255 = sbr.rel (%p253) target = $region28
        $region27: #{tpu_custom_call.1} parent=11 // pred_region
          %257 = vsyncadd [#allocation9], 0
          %s259 = sshll.u32 %s4, 4
          %s260 = int_to_ptr.hbm [resolvable:$true] %s259
          %s261 = sshll.u32 [#allocation10], 4
          %s262 = int_to_ptr.vmem [resolvable:$true] %s261
          %264 = dma.hbm_to_vmem [thread:$0]  %s260, 128, %s262, [#allocation9]
        $region28: #{tpu_custom_call.1} parent=11 // pred_fallthru
          _
        // Predicated region
        $region29: #{tpu_custom_call.1} parent=11 // pred_check
          %p265 = pneg %p153
        $region30: #{tpu_custom_call.1} parent=11 // pred_check_branch
          %267 = sbr.rel (%p265) target = $region32
        $region31: #{tpu_custom_call.1} parent=11 // pred_region
          %269 = vsyncadd [#allocation12], 0
          %s270 = sshll.u32 %s5, 4
          %s271 = int_to_ptr.hbm [resolvable:$true] %s270
          %s272 = sshll.u32 [#allocation11], 4
          %s273 = int_to_ptr.vmem [resolvable:$true] %s272
          %278 = dma.hbm_to_vmem [thread:$0]  %s271, 256, %s273, [#allocation12], 64, 64, 4
        $region32: #{tpu_custom_call.1} parent=11 // pred_fallthru
          _
        // Predicated region
        $region33: #{tpu_custom_call.1} parent=11 // pred_check
          %p279 = pneg %p174
        $region34: #{tpu_custom_call.1} parent=11 // pred_check_branch
          %281 = sbr.rel (%p279) target = $region36
        $region35: #{tpu_custom_call.1} parent=11 // pred_region
          _
        $region36: #{tpu_custom_call.1} parent=11 // pred_fallthru
          _
      $region12: #{tpu_custom_call.1} parent=5 // pred_fallthru
        _
      %p282 = scmp.lt.s32.totalorder %s22, 2
      // Predicated region
      $region37: #{tpu_custom_call.1} parent=5 // pred_check
        %p283 = pneg %p282
      $region38: #{tpu_custom_call.1} parent=5 // pred_check_branch
        %285 = sbr.rel (%p283) target = $region40
      $region39: #{tpu_custom_call.1} parent=5 // pred_region
        // Predicated region
        $region41: #{tpu_custom_call.1} parent=39 // pred_check
          %p286 = pneg %p42
        $region42: #{tpu_custom_call.1} parent=39 // pred_check_branch
          %288 = sbr.rel (%p286) target = $region44
        $region43: #{tpu_custom_call.1} parent=39 // pred_region
          %s289 = sand.u32 %s32, 1
          %s290 = scalar_lea.sflag [#allocation3], %s289
          %s291 = sand.u32 %s32, 1
          %s292 = smul.addr %s291, 8
          %s293 = scalar_lea.vmem [#allocation2], %s292
          %295 = vsyncadd %s290, 0
          %s296 = smul.addr %s22, 8
          %s297 = scalar_lea.hbm %s0, %s296
          %s299 = sshll.u32 %s297, 4
          %s300 = int_to_ptr.hbm [resolvable:$true] %s299
          %s301 = sshll.u32 %s293, 4
          %s302 = int_to_ptr.vmem [resolvable:$true] %s301
          %304 = dma.hbm_to_vmem [thread:$0]  %s300, 128, %s302, %s290
        $region44: #{tpu_custom_call.1} parent=39 // pred_fallthru
          _
      $region40: #{tpu_custom_call.1} parent=5 // pred_fallthru
        _
      %p305 = scmp.le.s32.totalorder 1, %s22
      %p306 = scmp.lt.s32.totalorder %s22, 3
      %p307 = pnand %p305, %p306
      %p308 = pneg %p307
      // Predicated region
      $region45: #{tpu_custom_call.1} parent=5 // pred_check
        _
      $region46: #{tpu_custom_call.1} parent=5 // pred_check_branch
        %310 = sbr.rel (%p307) target = $region48
      $region47: #{tpu_custom_call.1} parent=5 // pred_region
        %s311 = ssub.s32 %s22, 1
        %s312 = sand.u32 %s35, 1
        %s313 = scalar_lea.sflag [#allocation3], %s312
        %s314 = sand.u32 %s35, 1
        %s315 = smul.addr %s314, 8
        %s316 = scalar_lea.vmem [#allocation2], %s315
        // Predicated region
        $region49: #{tpu_custom_call.1} parent=47 // pred_check
          %p317 = pneg %p48
        $region50: #{tpu_custom_call.1} parent=47 // pred_check_branch
          %319 = sbr.rel (%p317) target = $region52
        $region51: #{tpu_custom_call.1} parent=47 // pred_region
          %321 = dma.done %s313, 128
        $region52: #{tpu_custom_call.1} parent=47 // pred_fallthru
          _
        // Predicated region
        $region53: #{tpu_custom_call.1} parent=47 // pred_check
          %p322 = pneg %p69
        $region54: #{tpu_custom_call.1} parent=47 // pred_check_branch
          %324 = sbr.rel (%p322) target = $region56
        $region55: #{tpu_custom_call.1} parent=47 // pred_region
          %326 = dma.done [#allocation6], 512
        $region56: #{tpu_custom_call.1} parent=47 // pred_fallthru
          _
        // Predicated region
        $region57: #{tpu_custom_call.1} parent=47 // pred_check
          %p327 = pneg %p90
        $region58: #{tpu_custom_call.1} parent=47 // pred_check_branch
          %329 = sbr.rel (%p327) target = $region60
        $region59: #{tpu_custom_call.1} parent=47 // pred_region
          %331 = dma.done [#allocation6], 32
        $region60: #{tpu_custom_call.1} parent=47 // pred_fallthru
          _
        // Predicated region
        $region61: #{tpu_custom_call.1} parent=47 // pred_check
          %p332 = pneg %p111
        $region62: #{tpu_custom_call.1} parent=47 // pred_check_branch
          %334 = sbr.rel (%p332) target = $region64
        $region63: #{tpu_custom_call.1} parent=47 // pred_region
          %336 = dma.done [#allocation9], 128
        $region64: #{tpu_custom_call.1} parent=47 // pred_fallthru
          _
        // Predicated region
        $region65: #{tpu_custom_call.1} parent=47 // pred_check
          %p337 = pneg %p132
        $region66: #{tpu_custom_call.1} parent=47 // pred_check_branch
          %339 = sbr.rel (%p337) target = $region68
        $region67: #{tpu_custom_call.1} parent=47 // pred_region
          %341 = dma.done [#allocation9], 128
        $region68: #{tpu_custom_call.1} parent=47 // pred_fallthru
          _
        // Predicated region
        $region69: #{tpu_custom_call.1} parent=47 // pred_check
          %p342 = pneg %p153
        $region70: #{tpu_custom_call.1} parent=47 // pred_check_branch
          %344 = sbr.rel (%p342) target = $region72
        $region71: #{tpu_custom_call.1} parent=47 // pred_region
          %346 = dma.done [#allocation12], 256
        $region72: #{tpu_custom_call.1} parent=47 // pred_fallthru
          _
        %s347 = sand.u32 %s35, 1
        %s348 = scalar_lea.sflag [#allocation3], %s347
        %s349 = sand.u32 %s35, 1
        %s350 = smul.addr %s349, 8
        %s351 = scalar_lea.vmem [#allocation2], %s350
        %p352 = pneg %p48
        %p353 = pneg %p45
        %p354 = pneg %p69
        %p355 = pneg %p66
        %p356 = pneg %p90
        %p357 = pneg %p87
        %p358 = pneg %p111
        %p359 = pneg %p108
        %p360 = pneg %p132
        %p361 = pneg %p129
        %p362 = pneg %p153
        %p363 = pneg %p150
        %p364 = pneg %p174
        %p365 = pneg %p171
        %p366 = pneg %p200
        %p367 = pneg %p197
        %s368 = sand.u32 %s187, 1
        %s369 = scalar_lea.sflag [#allocation4], %s368
        %s370 = sand.u32 %s187, 1
        %s371 = smul.addr %s370, 8
        %s372 = scalar_lea.vmem [#allocation13], %s371
        %v374 = vld [vmem:[%s316] sm:$0xff]
        %v375 = vpack.c.bf16 %v374, %v374
        %v376 = vld [vmem:[#allocation5] sm:$0xff]
        %v377 = vld [vmem:[#allocation5 + $0x8] sm:$0xff]
        %v378 = vld [vmem:[#allocation5 + $0x10] sm:$0xff]
        %v379 = vld [vmem:[#allocation5 + $0x18] sm:$0xff]
        %v380 = vld [vmem:[#allocation7] sm:$0x3]
        %v382 = vperm.slane %v380, 0
        %v383 = vperm.slane %v380, 1
        %v390 = vunpack.c.l.b16 %v376
        %v391 = vunpack.c.h.b16 %v376
        %v392 = vunpack.c.l.b16 %v377
        %v393 = vunpack.c.h.b16 %v377
        %v394 = vunpack.c.l.b16 %v378
        %v395 = vunpack.c.h.b16 %v378
        %v396 = vunpack.c.l.b16 %v379
        %v397 = vunpack.c.h.b16 %v379
        %v398 = vpack.c.b16 %v392, %v390
        %v399 = vpack.c.b16 %v393, %v391
        %v400 = vpack.c.b16 %v396, %v394
        %v401 = vpack.c.b16 %v397, %v395
        %vm406 = vcmask 261120
        %v408 = vsel %vm406, %v375, 0
        %410 = vmatpush.bf16.msra.mxu0 0
        %411 = vmatpush.bf16.msra.mxu0 0
        %412 = vmatpush.bf16.msra.mxu0 0
        %413 = vmatpush.bf16.msra.mxu0 0
        %414 = vmatpush.bf16.msra.mxu0 0
        %415 = vmatpush.bf16.msra.mxu0 0
        %416 = vmatpush.bf16.msra.mxu0 %v400
        %417 = vmatpush.bf16.msra.mxu0 %v398
        %418 = vmatmul.bf16.gmra.mxu0 %v408
        %v419 = vpop.f32.mrf.mxu0
        %v420 = vadd.f32 %v382, %v419
        %v421 = vpop.f32.mrf.mxu0
        %422 = vdwg.mxu0
        %423 = vmatpush.bf16.msra.mxu0 0
        %424 = vmatpush.bf16.msra.mxu0 0
        %425 = vmatpush.bf16.msra.mxu0 0
        %426 = vmatpush.bf16.msra.mxu0 0
        %427 = vmatpush.bf16.msra.mxu0 0
        %428 = vmatpush.bf16.msra.mxu0 0
        %429 = vmatpush.bf16.msra.mxu0 %v401
        %430 = vmatpush.bf16.msra.mxu0 %v399
        %431 = vmatmul.bf16.gmra.mxu0 %v408
        %v432 = vpop.f32.mrf.mxu0
        %v433 = vadd.f32 %v383, %v432
        %v434 = vpop.f32.mrf.mxu0
        %435 = vdwg.mxu0
        %v436 = vld [vmem:[#allocation8] sm:$0xff]
        %v437 = vld [vmem:[#allocation10] sm:$0xff]
        %v438 = vmul.f32 %v420, %v436
        %440 = vrot.lane.b32.xlu0 %v437, 96
        %v441 = vpop.permute.xlu0 %440
        %v443 = vmul.f32 %v420, %v441
        %445 = vrot.lane.b32.xlu0 %v443, 32
        %v446 = vpop.permute.xlu0 %445
        %v448 = vadd.f32 %v438, %v446
        %450 = vrot.lane.b32.xlu0 %v436, 32
        %v451 = vpop.permute.xlu0 %450
        %v453 = vmul.f32 %v420, %v451
        %v454 = vmul.f32 %v433, %v437
        %456 = vrot.lane.b32.xlu0 %v454, 32
        %v457 = vpop.permute.xlu0 %456
        %v459 = vadd.f32 %v453, %v457
        %v460 = vpack.c.bf16 %v448, %v448
        %v461 = vpack.c.bf16 %v459, %v459
        %v462 = vpack.c.bf16 %v420, %v420
        %v464 = vunpack.c.l.b16 %v461
        %v465 = vpack.c.b16 %v464, %v464
        %466 = vrot.lane.b32.xlu0 %v465, 96
        %v467 = vpop.permute.xlu0 %466
        %vm468 = vcmask 64512
        %v470 = vsel %vm468, %v460, 0
        %v473 = vsel %vm468, %v467, 0
        %475 = vmatpush.bf16.xpose.msra.mxu0 0
        %476 = vmatpush.bf16.xpose.msra.mxu0 0
        %477 = vmatpush.bf16.xpose.msra.mxu0 0
        %478 = vmatpush.bf16.xpose.msra.mxu0 0
        %479 = vmatpush.bf16.xpose.msra.mxu0 0
        %480 = vmatpush.bf16.xpose.msra.mxu0 0
        %481 = vmatpush.bf16.xpose.msra.mxu0 0
        %482 = vmatpush.bf16.xpose.msra.mxu0 %v473
        %483 = vmatmul.bf16.gmra.mxu0 %v470
        %v484 = vpop.f32.mrf.mxu0
        %v485 = vadd.f32 0.0, %v484
        %v486 = vpop.f32.mrf.mxu0
        %487 = vdwg.mxu0
        %v488 = vmul.f32 %v485, 0.35355338
        %v489 = vsel %vm468, %v488, -inf
        %490 = vmax.xlane.f32.xlu0 %v489
        %v491 = vpop.xlane.xlu0 %490
        %v492 = vsub.f32 %v488, %v491
        %v493 = vmul.f32 %v492, 1.442695
        %v494 = vpow.pop %v493
        %v495 = vsel %vm468, %v494, 0.0
        %496 = vadd.xlane.f32.xlu0 %v495
        %v497 = vpop.xlane.xlu0 %496
        %v498 = vrcp.pop %v497
        %v499 = vmul.f32 %v494, %v498
        %v500 = vpack.c.bf16 %v499, %v499
        %v502 = vunpack.c.l.b16 %v462
        %v503 = vpack.c.b16 %v502, %v502
        %504 = vrot.lane.b32.xlu0 %v503, 64
        %v505 = vpop.permute.xlu0 %504
        %v507 = vsel %vm468, %v500, 0
        %vm509 = vcmask 1043456
        %v511 = vsel %vm509, %v505, 0
        %513 = vmatpush.bf16.msra.mxu0 0
        %514 = vmatpush.bf16.msra.mxu0 0
        %515 = vmatpush.bf16.msra.mxu0 0
        %516 = vmatpush.bf16.msra.mxu0 0
        %517 = vmatpush.bf16.msra.mxu0 0
        %518 = vmatpush.bf16.msra.mxu0 0
        %519 = vmatpush.bf16.msra.mxu0 0
        %520 = vmatpush.bf16.msra.mxu0 %v511
        %521 = vmatmul.bf16.gmra.mxu0 %v507
        %v522 = vpop.f32.mrf.mxu0
        %v523 = vadd.f32 0.0, %v522
        %v524 = vpop.f32.mrf.mxu0
        %525 = vdwg.mxu0
        %v526 = vpack.c.bf16 %v523, %v523
        %v527 = vld [vmem:[#allocation11] sm:$0xf]
        %v529 = vunpack.c.l.b16 %v460
        %v530 = vpack.c.b16 %v529, %v529
        %531 = vrot.lane.b32.xlu0 %v530, 120
        %v532 = vpop.permute.xlu0 %531
        %533 = vrot.lane.b32.xlu0 %v465, 88
        %v534 = vpop.permute.xlu0 %533
        %v536 = vsel %vm468, %v532, 0
        %v539 = vsel %vm468, %v534, 0
        %541 = vmatpush.bf16.xpose.msra.mxu0 0
        %542 = vmatpush.bf16.xpose.msra.mxu0 0
        %543 = vmatpush.bf16.xpose.msra.mxu0 0
        %544 = vmatpush.bf16.xpose.msra.mxu0 0
        %545 = vmatpush.bf16.xpose.msra.mxu0 0
        %546 = vmatpush.bf16.xpose.msra.mxu0 0
        %547 = vmatpush.bf16.xpose.msra.mxu0 0
        %548 = vmatpush.bf16.xpose.msra.mxu0 %v539
        %549 = vmatmul.bf16.gmra.mxu0 %v536
        %v550 = vpop.f32.mrf.mxu0
        %v551 = vadd.f32 0.0, %v550
        %v552 = vpop.f32.mrf.mxu0
        %553 = vdwg.mxu0
        %v554 = vmul.f32 %v551, 0.35355338
        %v555 = vsel %vm468, %v554, -inf
        %556 = vmax.xlane.f32.xlu0 %v555
        %v557 = vpop.xlane.xlu0 %556
        %v558 = vsub.f32 %v554, %v557
        %v559 = vmul.f32 %v558, 1.442695
        %v560 = vpow.pop %v559
        %v561 = vsel %vm468, %v560, 0.0
        %562 = vadd.xlane.f32.xlu0 %v561
        %v563 = vpop.xlane.xlu0 %562
        %v564 = vrcp.pop %v563
        %v565 = vmul.f32 %v560, %v564
        %v566 = vpack.c.bf16 %v565, %v565
        %567 = vrot.lane.b32.xlu0 %v503, 56
        %v568 = vpop.permute.xlu0 %567
        %v570 = vsel %vm468, %v566, 0
        %v573 = vsel %vm509, %v568, 0
        %575 = vmatpush.bf16.msra.mxu0 0
        %576 = vmatpush.bf16.msra.mxu0 0
        %577 = vmatpush.bf16.msra.mxu0 0
        %578 = vmatpush.bf16.msra.mxu0 0
        %579 = vmatpush.bf16.msra.mxu0 0
        %580 = vmatpush.bf16.msra.mxu0 0
        %581 = vmatpush.bf16.msra.mxu0 0
        %582 = vmatpush.bf16.msra.mxu0 %v573
        %583 = vmatmul.bf16.gmra.mxu0 %v570
        %v584 = vpop.f32.mrf.mxu0
        %v585 = vadd.f32 0.0, %v584
        %v586 = vpop.f32.mrf.mxu0
        %587 = vdwg.mxu0
        %v588 = vpack.c.bf16 %v585, %v585
        %s589 = scalar_lea.vmem [#allocation11], 4
        %v590 = vld [vmem:[%s589] sm:$0xf]
        %v592 = vsel %vm468, %v588, 0
        %v595 = vsel %vm509, %v590, 0
        %597 = vmatpush.bf16.msra.mxu0 0
        %598 = vmatpush.bf16.msra.mxu0 0
        %599 = vmatpush.bf16.msra.mxu0 0
        %600 = vmatpush.bf16.msra.mxu0 0
        %601 = vmatpush.bf16.msra.mxu0 0
        %602 = vmatpush.bf16.msra.mxu0 0
        %603 = vmatpush.bf16.msra.mxu0 0
        %604 = vmatpush.bf16.msra.mxu0 %v595
        %605 = vmatmul.bf16.gmra.mxu0 %v592
        %v606 = vpop.f32.mrf.mxu0
        %v607 = vadd.f32 0.0, %v606
        %v608 = vpop.f32.mrf.mxu0
        %609 = vdwg.mxu0
        %v611 = vsel %vm468, %v526, 0
        %v614 = vsel %vm509, %v527, 0
        %616 = vmatpush.bf16.msra.mxu0 0
        %617 = vmatpush.bf16.msra.mxu0 0
        %618 = vmatpush.bf16.msra.mxu0 0
        %619 = vmatpush.bf16.msra.mxu0 0
        %620 = vmatpush.bf16.msra.mxu0 0
        %621 = vmatpush.bf16.msra.mxu0 0
        %622 = vmatpush.bf16.msra.mxu0 0
        %623 = vmatpush.bf16.msra.mxu0 %v614
        %624 = vmatmul.bf16.gmra.mxu0 %v611
        %v625 = vpop.f32.mrf.mxu0
        %v626 = vadd.f32 %v607, %v625
        %v627 = vpop.f32.mrf.mxu0
        %628 = vdwg.mxu0
        %629 = vrot.lane.b32.xlu0 %v530, 112
        %v630 = vpop.permute.xlu0 %629
        %631 = vrot.lane.b32.xlu0 %v465, 80
        %v632 = vpop.permute.xlu0 %631
        %v634 = vsel %vm468, %v630, 0
        %v637 = vsel %vm468, %v632, 0
        %639 = vmatpush.bf16.xpose.msra.mxu0 0
        %640 = vmatpush.bf16.xpose.msra.mxu0 0
        %641 = vmatpush.bf16.xpose.msra.mxu0 0
        %642 = vmatpush.bf16.xpose.msra.mxu0 0
        %643 = vmatpush.bf16.xpose.msra.mxu0 0
        %644 = vmatpush.bf16.xpose.msra.mxu0 0
        %645 = vmatpush.bf16.xpose.msra.mxu0 0
        %646 = vmatpush.bf16.xpose.msra.mxu0 %v637
        %647 = vmatmul.bf16.gmra.mxu0 %v634
        %v648 = vpop.f32.mrf.mxu0
        %v649 = vadd.f32 0.0, %v648
        %v650 = vpop.f32.mrf.mxu0
        %651 = vdwg.mxu0
        %v652 = vmul.f32 %v649, 0.35355338
        %v653 = vsel %vm468, %v652, -inf
        %654 = vmax.xlane.f32.xlu0 %v653
        %v655 = vpop.xlane.xlu0 %654
        %v656 = vsub.f32 %v652, %v655
        %v657 = vmul.f32 %v656, 1.442695
        %v658 = vpow.pop %v657
        %v659 = vsel %vm468, %v658, 0.0
        %660 = vadd.xlane.f32.xlu0 %v659
        %v661 = vpop.xlane.xlu0 %660
        %v662 = vrcp.pop %v661
        %v663 = vmul.f32 %v658, %v662
        %v664 = vpack.c.bf16 %v663, %v663
        %665 = vrot.lane.b32.xlu0 %v503, 48
        %v666 = vpop.permute.xlu0 %665
        %v668 = vsel %vm468, %v664, 0
        %v671 = vsel %vm509, %v666, 0
        %673 = vmatpush.bf16.msra.mxu0 0
        %674 = vmatpush.bf16.msra.mxu0 0
        %675 = vmatpush.bf16.msra.mxu0 0
        %676 = vmatpush.bf16.msra.mxu0 0
        %677 = vmatpush.bf16.msra.mxu0 0
        %678 = vmatpush.bf16.msra.mxu0 0
        %679 = vmatpush.bf16.msra.mxu0 0
        %680 = vmatpush.bf16.msra.mxu0 %v671
        %681 = vmatmul.bf16.gmra.mxu0 %v668
        %v682 = vpop.f32.mrf.mxu0
        %v683 = vadd.f32 0.0, %v682
        %v684 = vpop.f32.mrf.mxu0
        %685 = vdwg.mxu0
        %v686 = vpack.c.bf16 %v683, %v683
        %s687 = scalar_lea.vmem [#allocation11], 8
        %v688 = vld [vmem:[%s687] sm:$0xf]
        %v690 = vsel %vm468, %v686, 0
        %v693 = vsel %vm509, %v688, 0
        %695 = vmatpush.bf16.msra.mxu0 0
        %696 = vmatpush.bf16.msra.mxu0 0
        %697 = vmatpush.bf16.msra.mxu0 0
        %698 = vmatpush.bf16.msra.mxu0 0
        %699 = vmatpush.bf16.msra.mxu0 0
        %700 = vmatpush.bf16.msra.mxu0 0
        %701 = vmatpush.bf16.msra.mxu0 0
        %702 = vmatpush.bf16.msra.mxu0 %v693
        %703 = vmatmul.bf16.gmra.mxu0 %v690
        %v704 = vpop.f32.mrf.mxu0
        %v705 = vadd.f32 0.0, %v704
        %v706 = vpop.f32.mrf.mxu0
        %707 = vdwg.mxu0
        %v708 = vadd.f32 %v626, %v705
        %709 = vrot.lane.b32.xlu0 %v530, 104
        %v710 = vpop.permute.xlu0 %709
        %711 = vrot.lane.b32.xlu0 %v465, 72
        %v712 = vpop.permute.xlu0 %711
        %v714 = vsel %vm468, %v710, 0
        %v717 = vsel %vm468, %v712, 0
        %719 = vmatpush.bf16.xpose.msra.mxu0 0
        %720 = vmatpush.bf16.xpose.msra.mxu0 0
        %721 = vmatpush.bf16.xpose.msra.mxu0 0
        %722 = vmatpush.bf16.xpose.msra.mxu0 0
        %723 = vmatpush.bf16.xpose.msra.mxu0 0
        %724 = vmatpush.bf16.xpose.msra.mxu0 0
        %725 = vmatpush.bf16.xpose.msra.mxu0 0
        %726 = vmatpush.bf16.xpose.msra.mxu0 %v717
        %727 = vmatmul.bf16.gmra.mxu0 %v714
        %v728 = vpop.f32.mrf.mxu0
        %v729 = vadd.f32 0.0, %v728
        %v730 = vpop.f32.mrf.mxu0
        %731 = vdwg.mxu0
        %v732 = vmul.f32 %v729, 0.35355338
        %v733 = vsel %vm468, %v732, -inf
        %734 = vmax.xlane.f32.xlu0 %v733
        %v735 = vpop.xlane.xlu0 %734
        %v736 = vsub.f32 %v732, %v735
        %v737 = vmul.f32 %v736, 1.442695
        %v738 = vpow.pop %v737
        %v739 = vsel %vm468, %v738, 0.0
        %740 = vadd.xlane.f32.xlu0 %v739
        %v741 = vpop.xlane.xlu0 %740
        %v742 = vrcp.pop %v741
        %v743 = vmul.f32 %v738, %v742
        %v744 = vpack.c.bf16 %v743, %v743
        %745 = vrot.lane.b32.xlu0 %v503, 40
        %v746 = vpop.permute.xlu0 %745
        %v748 = vsel %vm468, %v744, 0
        %v751 = vsel %vm509, %v746, 0
        %753 = vmatpush.bf16.msra.mxu0 0
        %754 = vmatpush.bf16.msra.mxu0 0
        %755 = vmatpush.bf16.msra.mxu0 0
        %756 = vmatpush.bf16.msra.mxu0 0
        %757 = vmatpush.bf16.msra.mxu0 0
        %758 = vmatpush.bf16.msra.mxu0 0
        %759 = vmatpush.bf16.msra.mxu0 0
        %760 = vmatpush.bf16.msra.mxu0 %v751
        %761 = vmatmul.bf16.gmra.mxu0 %v748
        %v762 = vpop.f32.mrf.mxu0
        %v763 = vadd.f32 0.0, %v762
        %v764 = vpop.f32.mrf.mxu0
        %765 = vdwg.mxu0
        %v766 = vpack.c.bf16 %v763, %v763
        %s767 = scalar_lea.vmem [#allocation11], 12
        %v768 = vld [vmem:[%s767] sm:$0xf]
        %v770 = vsel %vm468, %v766, 0
        %v773 = vsel %vm509, %v768, 0
        %775 = vmatpush.bf16.msra.mxu0 0
        %776 = vmatpush.bf16.msra.mxu0 0
        %777 = vmatpush.bf16.msra.mxu0 0
        %778 = vmatpush.bf16.msra.mxu0 0
        %779 = vmatpush.bf16.msra.mxu0 0
        %780 = vmatpush.bf16.msra.mxu0 0
        %781 = vmatpush.bf16.msra.mxu0 0
        %782 = vmatpush.bf16.msra.mxu0 %v773
        %783 = vmatmul.bf16.gmra.mxu0 %v770
        %v784 = vpop.f32.mrf.mxu0
        %v785 = vadd.f32 0.0, %v784
        %v786 = vpop.f32.mrf.mxu0
        %787 = vdwg.mxu0
        %v788 = vadd.f32 %v708, %v785
        %v789 = vld [vmem:[%s6] sm:$0x1]
        %v791 = vperm.slane %v789, 0
        %v793 = vadd.f32 %v788, %v791
        %794 = vst.msk [vmem:[%s372] sm:$0xff] %vm406, %v793
        %s795 = sand.u32 %s187, 1
        %s796 = scalar_lea.sflag [#allocation4], %s795
        %s797 = sand.u32 %s187, 1
        %s798 = smul.addr %s797, 8
        %s799 = scalar_lea.vmem [#allocation13], %s798
        // Predicated region
        $region73: #{tpu_custom_call.1} parent=47 // pred_check
          %p800 = pneg %p197
        $region74: #{tpu_custom_call.1} parent=47 // pred_check_branch
          %802 = sbr.rel (%p800) target = $region76
        $region75: #{tpu_custom_call.1} parent=47 // pred_region
          %804 = vsyncadd %s796, 0
          %s805 = smul.addr %s27, 8
          %s806 = scalar_lea.hbm %s7, %s805
          %s808 = sshll.u32 %s799, 4
          %s809 = int_to_ptr.vmem [resolvable:$true] %s808
          %s810 = sshll.u32 %s806, 4
          %s811 = int_to_ptr.hbm [resolvable:$true] %s810
          %813 = dma.vmem_to_hbm [thread:$0]  %s809, 128, %s811, %s796
        $region76: #{tpu_custom_call.1} parent=47 // pred_fallthru
          _
      $region48: #{tpu_custom_call.1} parent=5 // pred_fallthru
        _
      %p814 = scmp.le.s32.totalorder 2, %s22
      // Predicated region
      $region77: #{tpu_custom_call.1} parent=5 // pred_check
        %p815 = pneg %p814
      $region78: #{tpu_custom_call.1} parent=5 // pred_check_branch
        %817 = sbr.rel (%p815) target = $region80
      $region79: #{tpu_custom_call.1} parent=5 // pred_region
        %s818 = ssub.s32 %s22, 2
        // Predicated region
        $region81: #{tpu_custom_call.1} parent=79 // pred_check
          %p819 = pneg %p203
        $region82: #{tpu_custom_call.1} parent=79 // pred_check_branch
          %821 = sbr.rel (%p819) target = $region84
        $region83: #{tpu_custom_call.1} parent=79 // pred_region
          %s822 = sand.u32 %s188, 1
          %s823 = scalar_lea.sflag [#allocation4], %s822
          %s824 = sand.u32 %s188, 1
          %s825 = smul.addr %s824, 8
          %s826 = scalar_lea.vmem [#allocation13], %s825
          %828 = dma.done %s823, 128
        $region84: #{tpu_custom_call.1} parent=79 // pred_fallthru
          _
      $region80: #{tpu_custom_call.1} parent=5 // pred_fallthru
        _
    $region6: #{tpu_custom_call.1} parent=1 // loop_footer
      %s26 = sadd.s32 1, %s22
    $region7: #{tpu_custom_call.1} parent=1 // loop_footer_branch
      %21 = sbr.rel target = $region3
    $region8: #{tpu_custom_call.1} parent=1 // loop_exit
      _
    %829 = vsyncpa [#allocation3], 1
    %s830 = scalar_lea.sflag [#allocation3], 1
    %831 = vsyncpa %s830, 1
    %832 = vsyncpa [#allocation6], 1
    %833 = vsyncpa [#allocation9], 1
    %834 = vsyncpa [#allocation12], 1
    %835 = vsyncpa [#allocation4], 1
    %s836 = scalar_lea.sflag [#allocation4], 1
    %837 = vsyncpa %s836, 1

</llo_original>
